<compile_context>
chip_gen: v5e
topology: v5e:2x2
jax: 0.10.0
libtpu: 0.0.40
codegen_flags: <defaults>
</compile_context>

<pallas_src>
import numpy as np
import jax
import jax.numpy as jnp
from jax.experimental import pallas as pl
from jax.experimental.pallas import tpu as pltpu


# ----------------------------------------------------------------------------
# Host-side helpers: pooling / upsampling matrices, BN folding
# ----------------------------------------------------------------------------
def adaptive_pool_matrix(in_size: int, out_size: int) -> np.ndarray:
    """P[i, h] = 1/len(region_i) if h in region_i else 0 (PyTorch AdaptiveAvgPool2d)."""
    P = np.zeros((out_size, in_size), dtype=np.float32)
    for i in range(out_size):
        start = (i * in_size) // out_size
        end = -((-(i + 1) * in_size) // out_size)  # ceil((i+1)*in/out)
        P[i, start:end] = 1.0 / float(end - start)
    return P


def bilinear_upsample_matrix(in_size: int, out_size: int) -> np.ndarray:
    """U[y, i]: bilinear interpolation weights, align_corners=True (1D, separable)."""
    U = np.zeros((out_size, in_size), dtype=np.float32)
    for y in range(out_size):
        if in_size == 1 or out_size == 1:
            src = 0.0
        else:
            src = y * (in_size - 1) / (out_size - 1)
        i0 = min(int(np.floor(src)), in_size - 1)
        i1 = min(i0 + 1, in_size - 1)
        w1 = src - i0
        U[y, i0] += 1.0 - w1
        U[y, i1] += w1
    return U


def fold_bn(conv_w, gamma, beta, mean, var, eps=1e-5):
    """Fold eval-mode BatchNorm2d into a 1x1 conv: y = Wf @ x + bf."""
    scale = gamma / np.sqrt(var + eps)
    Wf = conv_w * scale[:, None]
    bf = beta - mean * scale
    return Wf.astype(np.float32), bf.astype(np.float32)


# ----------------------------------------------------------------------------
# Fully fused PSPDecoder kernel: pooling + branch conv + upsample + identity
# concat + head 1x1 conv + BN + ReLU, for (batch b, spatial tile j).
# ----------------------------------------------------------------------------
def _psp_decoder_fused_kernel(xf_ref, pt_ref, wf_ref, bf_ref, mask_ref, ut_ref,
                              w2a_ref, w2b_ref, b2_ref, o_ref, y_ref):
    """
    xf_ref  : (1, C, HW)          bf16  full spatial slab (resident across HW tiles)
    pt_ref  : (HW, S)             bf16  stacked pooling matrices, S = sum(s^2)
    wf_ref  : (NB, C)             bf16  stacked per-branch 1x1-conv weights (BN folded)
    bf_ref  : (NB, 1)             f32   stacked branch biases
    mask_ref: (NB, S)             f32   block-diagonal branch mask
    ut_ref  : (S, HW_T)           bf16  stacked bilinear upsample matrices (col tile)
    w2a_ref : (HO, NB)            bf16  head conv block acting on branch channels
    w2b_ref : (HO, C)             bf16  head conv block acting on identity channels
    b2_ref  : (HO, 1)             f32   head bias (BN folded)
    o_ref   : (1, HO, HW_T)       f32   decoder output tile
    y_ref   : (NB, S)             f32   VMEM scratch: masked pooled+conv+ReLU result
    """
    j = pl.program_id(1)
    hw_tile = o_ref.shape[2]

    # Pooling + branch 1x1 conv + ReLU need the full spatial extent -> compute once
    # per batch element (first HW tile); the tiny result stays resident in scratch.
    # NOTE: relies on the HW grid axis executing sequentially ("arbitrary").
    @pl.when(j == 0)
    def _():
        pooled = jnp.dot(xf_ref[0], pt_ref[...],
                         preferred_element_type=jnp.float32)            # (C, S)
        y = jnp.dot(wf_ref[...], pooled.astype(jnp.bfloat16),
                    preferred_element_type=jnp.float32) + bf_ref[...]   # (NB, S)
        y_ref[...] = jnp.maximum(y, 0.0) * mask_ref[...]                # block-diag

    # Bilinear upsample (align_corners=True) of all branches for this spatial tile.
    up = jnp.dot(y_ref[...].astype(jnp.bfloat16), ut_ref[...],
                 preferred_element_type=jnp.float32)                    # (NB, HW_T)

    # Identity channels: slice the already-resident full slab (no second HBM read).
    start = pl.multiple_of(j * hw_tile, hw_tile)
    x_tile = xf_ref[0, :, pl.ds(start, hw_tile)]                        # (C, HW_T) bf16

    # Fused head: W2 @ concat([branches, identity]) + b2, ReLU -- expressed as two
    # matmuls on the split weight so the (2C, HW) concat never materializes.
    head = (jnp.dot(w2a_ref[...], up.astype(jnp.bfloat16),
                    preferred_element_type=jnp.float32)
            + jnp.dot(w2b_ref[...], x_tile,
                      preferred_element_type=jnp.float32)
            + b2_ref[...])                                              # (HO, HW_T)
    o_ref[0] = jnp.maximum(head, 0.0).astype(o_ref.dtype)


def _pick_hw_tile(HW: int, preferred: int = 512) -> int:
    """Largest 128-multiple divisor of HW that is <= preferred; fallback: full HW."""
    cands = [t for t in range(128, min(preferred, HW) + 1, 128) if HW % t == 0]
    if cands:
        return max(cands)
    return HW  # TODO(synk): pad HW to a multiple of 128 host-side instead.


def psp_decoder_forward(x, psp_params, head_params, *, hw_tile=512):
    """PSPDecoder.forward on the last encoder feature (eval mode).

    x: (B, C, H, W) f32 -> (B, head_out, H, W) f32.
    Dropout2d(p=0.2) is the identity in eval mode.
    """
    B, C, H, W = x.shape
    HW = H * W
    hw_tile = _pick_hw_tile(HW, hw_tile)
    n_hw = HW // hw_tile

    PT, UT = psp_params["PT"], psp_params["UT"]
    Wf, bfv, mask = psp_params["Wf"], psp_params["bf"], psp_params["mask"]
    W2a, W2b, b2 = head_params["W2a"], head_params["W2b"], head_params["b2"]
    nbr, S = mask.shape
    head_out = W2a.shape[0]

    # bf16 at the pallas_call boundary halves HBM traffic of the dominant X read;
    # accumulation stays f32 in-kernel.
    x2d = x.reshape(B, C, HW).astype(jnp.bfloat16)

    flops = int(2 * B * (C * HW * S + nbr * C * S + nbr * S * HW
                         + head_out * nbr * HW + head_out * C * HW))
    bytes_accessed = int(B * (C * HW * 2 + head_out * HW * 4)
                         + (HW * S + S * HW + nbr * C + head_out * (nbr + C)) * 2
                         + (nbr * S + nbr + head_out) * 4)

    out = pl.pallas_call(
        _psp_decoder_fused_kernel,
        out_shape=jax.ShapeDtypeStruct((B, head_out, HW), jnp.float32),
        grid_spec=pltpu.PrefetchScalarGridSpec(
            num_scalar_prefetch=0,
            grid=(B, n_hw),
            in_specs=[
                # Full X slab; index constant along j -> DMA'd once per batch element
                # and kept VMEM-resident across all HW tiles.
                pl.BlockSpec((1, C, HW), lambda b, j: (b, 0, 0)),
                # Grid-invariant constants (copied once).
                pl.BlockSpec((HW, S), lambda b, j: (0, 0)),
                pl.BlockSpec((nbr, C), lambda b, j: (0, 0)),
                pl.BlockSpec((nbr, 1), lambda b, j: (0, 0)),
                pl.BlockSpec((nbr, S), lambda b, j: (0, 0)),
                # Upsample matrix, column-tiled to match the output tile.
                pl.BlockSpec((S, hw_tile), lambda b, j: (0, j)),
                # Head conv blocks + bias (grid-invariant).
                pl.BlockSpec((head_out, nbr), lambda b, j: (0, 0)),
                pl.BlockSpec((head_out, C), lambda b, j: (0, 0)),
                pl.BlockSpec((head_out, 1), lambda b, j: (0, 0)),
            ],
            out_specs=pl.BlockSpec((1, head_out, hw_tile), lambda b, j: (b, 0, j)),
            scratch_shapes=[pltpu.VMEM((nbr, S), jnp.float32)],
        ),
        compiler_params=pltpu.CompilerParams(
            # HW axis must stay "arbitrary": y_ref scratch is filled at j==0 and
            # reused for later tiles of the same batch element.
            dimension_semantics=("parallel", "arbitrary"),
            vmem_limit_bytes=64 * 1024 * 1024,
        ),
        cost_estimate=pl.CostEstimate(flops=flops, transcendentals=0,
                                      bytes_accessed=bytes_accessed),
    )(x2d, PT, Wf, bfv, mask, UT, W2a, W2b, b2)
    return out.reshape(B, head_out, H, W)


# ----------------------------------------------------------------------------
# Pure numpy reference (independent implementation of the PyTorch semantics)
# ----------------------------------------------------------------------------
def _ref_adaptive_avg_pool(x, s):
    B, C, H, W = x.shape
    out = np.zeros((B, C, s, s), dtype=np.float64)
    for i in range(s):
        h0, h1 = (i * H) // s, -((-(i + 1) * H) // s)
        for j in range(s):
            w0, w1 = (j * W) // s, -((-(j + 1) * W) // s)
            out[:, :, i, j] = x[:, :, h0:h1, w0:w1].mean(axis=(2, 3))
    return out


def _ref_upsample_bilinear_ac(x, H, W):
    B, C, s, _ = x.shape
    out = np.zeros((B, C, H, W), dtype=np.float64)
    for yy in range(H):
        sy = 0.0 if s == 1 else yy * (s - 1) / (H - 1)
        y0 = min(int(np.floor(sy)), s - 1)
        y1 = min(y0 + 1, s - 1)
        wy = sy - y0
        for xx in range(W):
            sx = 0.0 if s == 1 else xx * (s - 1) / (W - 1)
            x0 = min(int(np.floor(sx)), s - 1)
            x1 = min(x0 + 1, s - 1)
            wx = sx - x0
            out[:, :, yy, xx] = (
                x[:, :, y0, x0] * (1 - wy) * (1 - wx)
                + x[:, :, y0, x1] * (1 - wy) * wx
                + x[:, :, y1, x0] * wy * (1 - wx)
                + x[:, :, y1, x1] * wy * wx
            )
    return out


def psp_module_reference(x_np, raw_params, sizes):
    outs = []
    B, C, H, W = x_np.shape
    for s, rp in zip(sizes, raw_params):
        pooled = _ref_adaptive_avg_pool(x_np.astype(np.float64), s)   # (B,C,s,s)
        W1 = rp["conv_w"].astype(np.float64)
        y = np.einsum("oc,bcij->boij", W1, pooled)
        if rp["use_bn"]:
            scale = rp["gamma"] / np.sqrt(rp["var"] + 1e-5)
            y = (y - rp["mean"][None, :, None, None]) * scale[None, :, None, None] \
                + rp["beta"][None, :, None, None]
        else:
            y = y + rp["bias"][None, :, None, None]
        y = np.maximum(y, 0.0)
        outs.append(_ref_upsample_bilinear_ac(y, H, W))
    outs.append(x_np.astype(np.float64))
    return np.concatenate(outs, axis=1)


def psp_decoder_reference(x_np, raw_branches, sizes, raw_head):
    psp = psp_module_reference(x_np, raw_branches, sizes)             # (B, 2C, H, W)
    W2 = raw_head["conv_w"].astype(np.float64)
    y = np.einsum("oc,bchw->bohw", W2, psp)
    scale = raw_head["gamma"] / np.sqrt(raw_head["var"] + 1e-5)
    y = (y - raw_head["mean"][None, :, None, None]) * scale[None, :, None, None] \
        + raw_head["beta"][None, :, None, None]
    y = np.maximum(y, 0.0)
    return psp, y


# ----------------------------------------------------------------------------
# Main
# ----------------------------------------------------------------------------
if __name__ == "__main__":
    B, C, H, W = 2, 4, 32, 32          # HW = 1024 -> hw_tile=512, 2 tiles per batch
    sizes = (1, 2, 3, 6)
    Co = C // len(sizes)               # out_channels per PSP branch
    head_out = 8                       # PSPDecoder out_channels (512 in prod; demo)

    key = jax.random.PRNGKey(0)
    key, kx = jax.random.split(key)
    x = jax.random.normal(kx, (B, C, H, W), dtype=jnp.float32)
    x_np = np.asarray(x)

    # ---- PSP branch parameters (stacked host-side for the fused kernel) ----
    S = sum(s * s for s in sizes)
    nbr = len(sizes) * Co
    raw_branches = []
    PT_cols, UT_rows, Wf_rows, bf_rows = [], [], [], []
    mask = np.zeros((nbr, S), dtype=np.float32)
    off = 0
    for bi, s in enumerate(sizes):
        use_bn = s != 1                # PSPBlock disables batchnorm when pool_size == 1
        key, k1, k2, k3, k4, k5 = jax.random.split(key, 6)
        conv_w = np.asarray(jax.random.normal(k1, (Co, C)) * 0.1, dtype=np.float32)
        if use_bn:
            gamma = np.asarray(jax.random.uniform(k2, (Co,), minval=0.5, maxval=1.5), np.float32)
            beta = np.asarray(jax.random.normal(k3, (Co,)) * 0.1, np.float32)
            mean = np.asarray(jax.random.normal(k4, (Co,)) * 0.1, np.float32)
            var = np.asarray(jax.random.uniform(k5, (Co,), minval=0.5, maxval=1.5), np.float32)
            Wf_b, bf_b = fold_bn(conv_w, gamma, beta, mean, var)
            raw_branches.append(dict(conv_w=conv_w, use_bn=True,
                                     gamma=gamma, beta=beta, mean=mean, var=var))
        else:
            bias = np.asarray(jax.random.normal(k2, (Co,)) * 0.1, np.float32)
            Wf_b, bf_b = conv_w, bias
            raw_branches.append(dict(conv_w=conv_w, use_bn=False, bias=bias))

        Py = adaptive_pool_matrix(H, s)
        Px = adaptive_pool_matrix(W, s)
        Uy = bilinear_upsample_matrix(s, H)
        Ux = bilinear_upsample_matrix(s, W)
        PT_cols.append(np.kron(Py, Px).T)     # (HW, s*s)
        UT_rows.append(np.kron(Uy, Ux).T)     # (s*s, HW)
        Wf_rows.append(Wf_b)
        bf_rows.append(bf_b.reshape(Co, 1))
        mask[bi * Co:(bi + 1) * Co, off:off + s * s] = 1.0
        off += s * s

    psp_params = dict(
        PT=jnp.asarray(np.concatenate(PT_cols, axis=1), dtype=jnp.bfloat16),  # (HW, S)
        UT=jnp.asarray(np.concatenate(UT_rows, axis=0), dtype=jnp.bfloat16),  # (S, HW)
        Wf=jnp.asarray(np.concatenate(Wf_rows, axis=0), dtype=jnp.bfloat16),  # (nbr, C)
        bf=jnp.asarray(np.concatenate(bf_rows, axis=0), dtype=jnp.float32),   # (nbr, 1)
        mask=jnp.asarray(mask, dtype=jnp.float32),                            # (nbr, S)
    )

    # ---- decoder head: Conv2dReLU(2C -> head_out) with BN folded, split for fusion ----
    key, k1, k2, k3, k4, k5 = jax.random.split(key, 6)
    conv2_w = np.asarray(jax.random.normal(k1, (head_out, 2 * C)) * 0.1, np.float32)
    gamma2 = np.asarray(jax.random.uniform(k2, (head_out,), minval=0.5, maxval=1.5), np.float32)
    beta2 = np.asarray(jax.random.normal(k3, (head_out,)) * 0.1, np.float32)
    mean2 = np.asarray(jax.random.normal(k4, (head_out,)) * 0.1, np.float32)
    var2 = np.asarray(jax.random.uniform(k5, (head_out,), minval=0.5, maxval=1.5), np.float32)
    W2f, b2f = fold_bn(conv2_w, gamma2, beta2, mean2, var2)
    raw_head = dict(conv_w=conv2_w, gamma=gamma2, beta=beta2, mean=mean2, var=var2)
    head_params = dict(
        W2a=jnp.asarray(W2f[:, :nbr], jnp.bfloat16),                  # acts on branch channels
        W2b=jnp.asarray(W2f[:, nbr:], jnp.bfloat16),                  # acts on identity channels
        b2=jnp.asarray(b2f.reshape(head_out, 1), jnp.float32),
    )

    dec_out = psp_decoder_forward(x, psp_params, head_params)
    dec_out = jax.block_until_ready(dec_out)
    assert dec_out.shape == (B, head_out, H, W), dec_out.shape

    _, ref_dec = psp_decoder_reference(x_np, raw_branches, sizes, raw_head)
    # bf16 operands in the fused kernel -> loosened tolerance vs the f32 reference.
    np.testing.assert_allclose(np.asarray(dec_out), ref_dec, rtol=3e-2, atol=3e-2)

    # TODO(synk): Dropout2d(p=0.2) is the identity in eval mode; training-mode
    # channel dropout (RNG) is not implemented here.
    print("KERNEL_OK")
</pallas_src>

<mosaic_0001>
module attributes {stable_mosaic.version = 11 : i64} {
  func.func @_psp_decoder_fused_kernel(%arg0: i32, %arg1: i32, %arg2: memref<1x4x1024xbf16, #tpu.memory_space<vmem>>, %arg3: memref<1024x50xbf16, #tpu.memory_space<vmem>>, %arg4: memref<4x4xbf16, #tpu.memory_space<vmem>>, %arg5: memref<4x1xf32, #tpu.memory_space<vmem>>, %arg6: memref<4x50xf32, #tpu.memory_space<vmem>>, %arg7: memref<50x512xbf16, #tpu.memory_space<vmem>>, %arg8: memref<8x4xbf16, #tpu.memory_space<vmem>>, %arg9: memref<8x4xbf16, #tpu.memory_space<vmem>>, %arg10: memref<8x1xf32, #tpu.memory_space<vmem>>, %arg11: memref<1x8x512xf32, #tpu.memory_space<vmem>>, %arg12: memref<4x50xf32, #tpu.memory_space<vmem>>) attributes {dimension_semantics = [#tpu.dimension_semantics<parallel>, #tpu.dimension_semantics<arbitrary>], iteration_bounds = array<i64: 2, 2>, scalar_prefetch = 0 : i64, scratch_operands = 1 : i64, tpu.core_type = #tpu.core_type<tc>, window_params = [{transform_indices = @transform_0, window_bounds = array<i64: 1, 4, 1024>}, {pipeline_mode = #tpu.pipeline_mode<synchronous>, transform_indices = @transform_1, window_bounds = array<i64: 1024, 50>}, {pipeline_mode = #tpu.pipeline_mode<synchronous>, transform_indices = @transform_2, window_bounds = array<i64: 4, 4>}, {pipeline_mode = #tpu.pipeline_mode<synchronous>, transform_indices = @transform_3, window_bounds = array<i64: 4, 1>}, {pipeline_mode = #tpu.pipeline_mode<synchronous>, transform_indices = @transform_4, window_bounds = array<i64: 4, 50>}, {transform_indices = @transform_5, window_bounds = array<i64: 50, 512>}, {pipeline_mode = #tpu.pipeline_mode<synchronous>, transform_indices = @transform_6, window_bounds = array<i64: 8, 4>}, {pipeline_mode = #tpu.pipeline_mode<synchronous>, transform_indices = @transform_7, window_bounds = array<i64: 8, 4>}, {pipeline_mode = #tpu.pipeline_mode<synchronous>, transform_indices = @transform_8, window_bounds = array<i64: 8, 1>}, {transform_indices = @transform_9, window_bounds = array<i64: 1, 8, 512>}]} {
    %c0_i32 = arith.constant 0 : i32
    %0 = arith.cmpi eq, %arg1, %c0_i32 : i32
    %1 = arith.extui %0 : i1 to i32
    %c0_i32_0 = arith.constant 0 : i32
    %2 = arith.cmpi ne, %1, %c0_i32_0 : i32
    scf.if %2 {
      %c0_18 = arith.constant 0 : index
      %c0_19 = arith.constant 0 : index
      %c0_20 = arith.constant 0 : index
      %26 = vector.load %arg2[%c0_18, %c0_19, %c0_20] : memref<1x4x1024xbf16, #tpu.memory_space<vmem>>, vector<1x4x1024xbf16>
      %27 = vector.shape_cast %26 : vector<1x4x1024xbf16> to vector<4x1024xbf16>
      %c0_21 = arith.constant 0 : index
      %c0_22 = arith.constant 0 : index
      %28 = vector.load %arg3[%c0_21, %c0_22] : memref<1024x50xbf16, #tpu.memory_space<vmem>>, vector<1024x50xbf16>
      %cst_23 = arith.constant dense<0.000000e+00> : vector<4x50xf32>
      %29 = tpu.matmul %27, %28, %cst_23 {dimension_numbers = #tpu.dot_dimension_numbers<[1], [0], [0], [1], [0, 0, 1, 1], [], []>} : vector<4x1024xbf16>, vector<1024x50xbf16>, vector<4x50xf32> -> vector<4x50xf32>
      %c0_24 = arith.constant 0 : index
      %c0_25 = arith.constant 0 : index
      %30 = vector.load %arg4[%c0_24, %c0_25] : memref<4x4xbf16, #tpu.memory_space<vmem>>, vector<4x4xbf16>
      %31 = arith.truncf %29 : vector<4x50xf32> to vector<4x50xbf16>
      %cst_26 = arith.constant dense<0.000000e+00> : vector<4x50xf32>
      %32 = tpu.matmul %30, %31, %cst_26 {dimension_numbers = #tpu.dot_dimension_numbers<[1], [0], [0], [1], [0, 0, 1, 1], [], []>} : vector<4x4xbf16>, vector<4x50xbf16>, vector<4x50xf32> -> vector<4x50xf32>
      %c0_27 = arith.constant 0 : index
      %c0_28 = arith.constant 0 : index
      %33 = vector.load %arg5[%c0_27, %c0_28] : memref<4x1xf32, #tpu.memory_space<vmem>>, vector<4x1xf32>
      %34 = vector.broadcast %33 : vector<4x1xf32> to vector<4x50xf32>
      %35 = arith.addf %32, %34 : vector<4x50xf32>
      %cst_29 = arith.constant 0.000000e+00 : f32
      %36 = vector.broadcast %cst_29 : f32 to vector<4x50xf32>
      %37 = arith.maximumf %35, %36 : vector<4x50xf32>
      %c0_30 = arith.constant 0 : index
      %c0_31 = arith.constant 0 : index
      %38 = vector.load %arg6[%c0_30, %c0_31] : memref<4x50xf32, #tpu.memory_space<vmem>>, vector<4x50xf32>
      %39 = arith.mulf %37, %38 : vector<4x50xf32>
      %c0_32 = arith.constant 0 : index
      %c0_33 = arith.constant 0 : index
      %40 = vector.load %arg12[%c0_32, %c0_33] : memref<4x50xf32, #tpu.memory_space<vmem>>, vector<4x50xf32>
      tpu.vector_store %arg12[%c0_32, %c0_33], %39 {strides = array<i32>} : memref<4x50xf32, #tpu.memory_space<vmem>>, vector<4x50xf32>,
    } else {
    }
    %c0 = arith.constant 0 : index
    %c0_1 = arith.constant 0 : index
    %3 = vector.load %arg12[%c0, %c0_1] : memref<4x50xf32, #tpu.memory_space<vmem>>, vector<4x50xf32>
    %4 = arith.truncf %3 : vector<4x50xf32> to vector<4x50xbf16>
    %c0_2 = arith.constant 0 : index
    %c0_3 = arith.constant 0 : index
    %5 = vector.load %arg7[%c0_2, %c0_3] : memref<50x512xbf16, #tpu.memory_space<vmem>>, vector<50x512xbf16>
    %cst = arith.constant dense<0.000000e+00> : vector<4x512xf32>
    %6 = tpu.matmul %4, %5, %cst {dimension_numbers = #tpu.dot_dimension_numbers<[1], [0], [0], [1], [0, 0, 1, 1], [], []>} : vector<4x50xbf16>, vector<50x512xbf16>, vector<4x512xf32> -> vector<4x512xf32>
    %c512_i32 = arith.constant 512 : i32
    %7 = arith.muli %arg1, %c512_i32 : i32
    %8 = tpu.assume_multiple %7, 512 : i32
    %c0_4 = arith.constant 0 : index
    %c0_5 = arith.constant 0 : index
    %9 = arith.index_cast %8 : i32 to index
    %10 = vector.load %arg2[%c0_4, %c0_5, %9] : memref<1x4x1024xbf16, #tpu.memory_space<vmem>>, vector<1x4x512xbf16>
    %11 = vector.shape_cast %10 : vector<1x4x512xbf16> to vector<4x512xbf16>
    %c0_6 = arith.constant 0 : index
    %c0_7 = arith.constant 0 : index
    %12 = vector.load %arg8[%c0_6, %c0_7] : memref<8x4xbf16, #tpu.memory_space<vmem>>, vector<8x4xbf16>
    %13 = arith.truncf %6 : vector<4x512xf32> to vector<4x512xbf16>
    %cst_8 = arith.constant dense<0.000000e+00> : vector<8x512xf32>
    %14 = tpu.matmul %12, %13, %cst_8 {dimension_numbers = #tpu.dot_dimension_numbers<[1], [0], [0], [1], [0, 0, 1, 1], [], []>} : vector<8x4xbf16>, vector<4x512xbf16>, vector<8x512xf32> -> vector<8x512xf32>
    %c0_9 = arith.constant 0 : index
    %c0_10 = arith.constant 0 : index
    %15 = vector.load %arg9[%c0_9, %c0_10] : memref<8x4xbf16, #tpu.memory_space<vmem>>, vector<8x4xbf16>
    %cst_11 = arith.constant dense<0.000000e+00> : vector<8x512xf32>
    %16 = tpu.matmul %15, %11, %cst_11 {dimension_numbers = #tpu.dot_dimension_numbers<[1], [0], [0], [1], [0, 0, 1, 1], [], []>} : vector<8x4xbf16>, vector<4x512xbf16>, vector<8x512xf32> -> vector<8x512xf32>
    %17 = arith.addf %14, %16 : vector<8x512xf32>
    %c0_12 = arith.constant 0 : index
    %c0_13 = arith.constant 0 : index
    %18 = vector.load %arg10[%c0_12, %c0_13] : memref<8x1xf32, #tpu.memory_space<vmem>>, vector<8x1xf32>
    %19 = vector.broadcast %18 : vector<8x1xf32> to vector<8x512xf32>
    %20 = arith.addf %17, %19 : vector<8x512xf32>
    %cst_14 = arith.constant 0.000000e+00 : f32
    %21 = vector.broadcast %cst_14 : f32 to vector<8x512xf32>
    %22 = arith.maximumf %20, %21 : vector<8x512xf32>
    %c0_15 = arith.constant 0 : index
    %c0_16 = arith.constant 0 : index
    %c0_17 = arith.constant 0 : index
    %23 = vector.load %arg11[%c0_15, %c0_16, %c0_17] : memref<1x8x512xf32, #tpu.memory_space<vmem>>, vector<1x8x512xf32>
    %24 = vector.shape_cast %23 : vector<1x8x512xf32> to vector<8x512xf32>
    %25 = vector.shape_cast %22 : vector<8x512xf32> to vector<1x8x512xf32>
    tpu.vector_store %arg11[%c0_15, %c0_16, %c0_17], %25 {strides = array<i32>} : memref<1x8x512xf32, #tpu.memory_space<vmem>>, vector<1x8x512xf32>,
    return
  }
  func.func @transform_0(%arg0: i32, %arg1: i32) -> (i32, i32, i32) {
    %c0_i32 = arith.constant 0 : i32
    %c0_i32_0 = arith.constant 0 : i32
    %c0_i32_1 = arith.constant 0 : i32
    return %arg0, %c0_i32, %c0_i32_0 : i32, i32, i32
  }
  func.func @transform_1(%arg0: i32, %arg1: i32) -> (i32, i32) {
    %c0_i32 = arith.constant 0 : i32
    %c0_i32_0 = arith.constant 0 : i32
    %c0_i32_1 = arith.constant 0 : i32
    return %c0_i32, %c0_i32_0 : i32, i32
  }
  func.func @transform_2(%arg0: i32, %arg1: i32) -> (i32, i32) {
    %c0_i32 = arith.constant 0 : i32
    %c0_i32_0 = arith.constant 0 : i32
    %c0_i32_1 = arith.constant 0 : i32
    return %c0_i32, %c0_i32_0 : i32, i32
  }
  func.func @transform_3(%arg0: i32, %arg1: i32) -> (i32, i32) {
    %c0_i32 = arith.constant 0 : i32
    %c0_i32_0 = arith.constant 0 : i32
    %c0_i32_1 = arith.constant 0 : i32
    return %c0_i32, %c0_i32_0 : i32, i32
  }
  func.func @transform_4(%arg0: i32, %arg1: i32) -> (i32, i32) {
    %c0_i32 = arith.constant 0 : i32
    %c0_i32_0 = arith.constant 0 : i32
    %c0_i32_1 = arith.constant 0 : i32
    return %c0_i32, %c0_i32_0 : i32, i32
  }
  func.func @transform_5(%arg0: i32, %arg1: i32) -> (i32, i32) {
    %c0_i32 = arith.constant 0 : i32
    %c0_i32_0 = arith.constant 0 : i32
    return %c0_i32, %arg1 : i32, i32
  }
  func.func @transform_6(%arg0: i32, %arg1: i32) -> (i32, i32) {
    %c0_i32 = arith.constant 0 : i32
    %c0_i32_0 = arith.constant 0 : i32
    %c0_i32_1 = arith.constant 0 : i32
    return %c0_i32, %c0_i32_0 : i32, i32
  }
  func.func @transform_7(%arg0: i32, %arg1: i32) -> (i32, i32) {
    %c0_i32 = arith.constant 0 : i32
    %c0_i32_0 = arith.constant 0 : i32
    %c0_i32_1 = arith.constant 0 : i32
    return %c0_i32, %c0_i32_0 : i32, i32
  }
  func.func @transform_8(%arg0: i32, %arg1: i32) -> (i32, i32) {
    %c0_i32 = arith.constant 0 : i32
    %c0_i32_0 = arith.constant 0 : i32
    %c0_i32_1 = arith.constant 0 : i32
    return %c0_i32, %c0_i32_0 : i32, i32
  }
  func.func @transform_9(%arg0: i32, %arg1: i32) -> (i32, i32, i32) {
    %c0_i32 = arith.constant 0 : i32
    %c0_i32_0 = arith.constant 0 : i32
    return %arg0, %c0_i32, %arg1 : i32, i32, i32
  }
}

</mosaic_0001>

<llo_original>
// kernel: tpu_custom_call.1
$region0: #{tpu_custom_call.1}
  #allocation0 [shape = 'u32[]', space=smem, size = 0x4, offset = 0x4, fixed_abs, tag = 'smem constant byte address 0x4 - core index']
  #allocation1 [shape = 'u32[72,128]{1,0:T(1,128)}', space=vmem, size = 0x9000, scoped, tag = 'internal scratch']
  #allocation2 [shape = 'f32[4,50]{1,0:T(4,128)}', space=vmem, size = 0x800, scoped, tag = 'scratch operand']
  %s0 = inlined_call_operand.vmem [shape: bf16[2,4,1024], index: 0, kind: input, shape index: {}]
  %s1 = inlined_call_operand.vmem [shape: bf16[1024,50], index: 1, kind: input, shape index: {}]
  %s2 = inlined_call_operand.vmem [shape: bf16[4,4], index: 2, kind: input, shape index: {}]
  %s3 = inlined_call_operand.vmem [shape: f32[4,1], index: 3, kind: input, shape index: {}]
  %s4 = inlined_call_operand.vmem [shape: f32[4,50], index: 4, kind: input, shape index: {}]
  %s5 = inlined_call_operand.vmem [shape: bf16[50,1024], index: 5, kind: input, shape index: {}]
  %s6 = inlined_call_operand.vmem [shape: bf16[8,4], index: 6, kind: input, shape index: {}]
  %s7 = inlined_call_operand.vmem [shape: bf16[8,4], index: 7, kind: input, shape index: {}]
  %s8 = inlined_call_operand.vmem [shape: f32[8,1], index: 8, kind: input, shape index: {}]
  %s9 = inlined_call_operand.hbm [shape: f32[2,8,1024], index: 9, kind: output, shape index: {}]
  %s10 = sld [smem:[#allocation0]]
  $region96: #{tpu_custom_call.1} parent=0
    _
  %s12 = ssub.s32 1, %s10
  %s13 = scalar_select 0, %s12, %s10
  $region1: #{tpu_custom_call.1} parent=0
    #allocation3 [shape = 'u8[114688]{0}', space=vmem, size = 0x1c000, scoped, tag = 'input window, operand 5']
    #allocation4 [shape = 'u8[32768]{0}', space=vmem, size = 0x8000, scoped, tag = 'output window, operand 0']
    #allocation5 [shape = 's32[2]{0}', space=sflag, size = 0x8, scoped, tag = 'scoped memory for tpu_custom_call.1']
    %14 = vsyncpa [#allocation5], 0
    %s15 = scalar_lea.sflag [#allocation5], 1
    %16 = vsyncpa %s15, 0
    loop: start=0, step=1, limit=6
    $region2: #{tpu_custom_call.1} parent=1 // loop_pre_header
      _
    $region3: #{tpu_custom_call.1} parent=1 // loop_header
      %s18 = sphi 0, %s22
      %p19 = scmp.ge.s32.totalorder %s18, 6
      %s25 = sphi 0, %s37
      %s26 = sphi 0, %s33
      %s27 = sphi 0, %s25
      %s28 = sphi 0, %s26
      %s29 = sphi 0, %s27
      %s30 = sphi 0, %s28
      %s40 = sphi 0, %s42
      %s43 = sphi 0, %s40
      %s44 = sphi 0, %s43
      %s60 = sphi 0, %s44
      %s64 = sphi 0, %s64
      %s66 = sphi 0, %s64
      %s67 = sphi 0, %s66
      %s81 = sphi 0, %s67
      %s85 = sphi 0, %s85
      %s87 = sphi 0, %s85
      %s88 = sphi 0, %s87
      %s102 = sphi 0, %s88
      %s106 = sphi 0, %s106
      %s108 = sphi 0, %s106
      %s109 = sphi 0, %s108
      %s123 = sphi 0, %s109
      %s127 = sphi 0, %s127
      %s129 = sphi 0, %s127
      %s130 = sphi 0, %s129
      %s144 = sphi 0, %s130
      %s150 = sphi 0, %s152
      %s153 = sphi 0, %s150
      %s154 = sphi 0, %s153
      %s170 = sphi 0, %s154
      %s174 = sphi 0, %s174
      %s176 = sphi 0, %s174
      %s177 = sphi 0, %s176
      %s191 = sphi 0, %s177
      %s195 = sphi 0, %s195
      %s197 = sphi 0, %s195
      %s198 = sphi 0, %s197
      %s212 = sphi 0, %s198
      %s216 = sphi 0, %s216
      %s218 = sphi 0, %s216
      %s219 = sphi 0, %s218
      %s233 = sphi 0, %s219
      %s241 = sphi 0, %s243
      %s244 = sphi 0, %s241
      %s245 = sphi 0, %s244
      %s261 = sphi 0, %s245
    $region4: #{tpu_custom_call.1} parent=1 // loop_header_branch
      %21 = sbr.rel (%p19) target = $region8
    $region5: #{tpu_custom_call.1} parent=1 // loop_body
      %s23 = ssub.s32 %s18, 1
      %s24 = ssub.s32 %s18, 2
      %s31 = sadd.s32 1, %s26
      %p32 = scmp.ge.s32.totalorder %s31, 2
      %s33 = scalar_select %p32, 0, %s31
      %s34 = sadd.s32 1, %s25
      %s35 = scalar_select %p32, %s34, %s25
      %p36 = scmp.ge.s32.totalorder %s35, 2
      %s37 = scalar_select %p36, 0, %s35
      %s38 = ssub.s32 %s25, %s37
      %p39 = scmp.eq.s32.totalorder %s38, 0
      %s41 = sadd.s32 %s40, 1
      %s42 = scalar_select %p39, %s40, %s41
      %p45 = pneg %p39
      %p46 = scmp.eq.s32.totalorder %s18, 3
      %p47 = por %p45, %p46
      %p48 = scmp.ne.s32.totalorder %s40, %s43
      %p49 = scmp.eq.s32.totalorder %s18, 0
      %p50 = por %p48, %p49
      %p51 = scmp.ne.s32.totalorder %s40, %s43
      %p52 = scmp.eq.s32.totalorder %s23, 3
      %p53 = por %p51, %p52
      %p54 = scmp.ne.s32.totalorder %s43, %s44
      %p55 = scmp.eq.s32.totalorder %s23, 0
      %p56 = por %p54, %p55
      %p57 = scmp.ne.s32.totalorder %s43, %s44
      %p58 = scmp.eq.s32.totalorder %s24, 3
      %p59 = por %p57, %p58
      %p61 = scmp.ne.s32.totalorder %s44, %s60
      %p62 = scmp.eq.s32.totalorder %s24, 0
      %p63 = por %p61, %p62
      %s65 = sadd.s32 %s64, 1
      %p68 = scmp.eq.s32.totalorder %s18, 3
      %p69 = scmp.ne.s32.totalorder %s64, %s66
      %p70 = scmp.eq.s32.totalorder %s18, 0
      %p71 = por %p69, %p70
      %p72 = scmp.ne.s32.totalorder %s64, %s66
      %p73 = scmp.eq.s32.totalorder %s23, 3
      %p74 = por %p72, %p73
      %p75 = scmp.ne.s32.totalorder %s66, %s67
      %p76 = scmp.eq.s32.totalorder %s23, 0
      %p77 = por %p75, %p76
      %p78 = scmp.ne.s32.totalorder %s66, %s67
      %p79 = scmp.eq.s32.totalorder %s24, 3
      %p80 = por %p78, %p79
      %p82 = scmp.ne.s32.totalorder %s67, %s81
      %p83 = scmp.eq.s32.totalorder %s24, 0
      %p84 = por %p82, %p83
      %s86 = sadd.s32 %s85, 1
      %p89 = scmp.eq.s32.totalorder %s18, 3
      %p90 = scmp.ne.s32.totalorder %s85, %s87
      %p91 = scmp.eq.s32.totalorder %s18, 0
      %p92 = por %p90, %p91
      %p93 = scmp.ne.s32.totalorder %s85, %s87
      %p94 = scmp.eq.s32.totalorder %s23, 3
      %p95 = por %p93, %p94
      %p96 = scmp.ne.s32.totalorder %s87, %s88
      %p97 = scmp.eq.s32.totalorder %s23, 0
      %p98 = por %p96, %p97
      %p99 = scmp.ne.s32.totalorder %s87, %s88
      %p100 = scmp.eq.s32.totalorder %s24, 3
      %p101 = por %p99, %p100
      %p103 = scmp.ne.s32.totalorder %s88, %s102
      %p104 = scmp.eq.s32.totalorder %s24, 0
      %p105 = por %p103, %p104
      %s107 = sadd.s32 %s106, 1
      %p110 = scmp.eq.s32.totalorder %s18, 3
      %p111 = scmp.ne.s32.totalorder %s106, %s108
      %p112 = scmp.eq.s32.totalorder %s18, 0
      %p113 = por %p111, %p112
      %p114 = scmp.ne.s32.totalorder %s106, %s108
      %p115 = scmp.eq.s32.totalorder %s23, 3
      %p116 = por %p114, %p115
      %p117 = scmp.ne.s32.totalorder %s108, %s109
      %p118 = scmp.eq.s32.totalorder %s23, 0
      %p119 = por %p117, %p118
      %p120 = scmp.ne.s32.totalorder %s108, %s109
      %p121 = scmp.eq.s32.totalorder %s24, 3
      %p122 = por %p120, %p121
      %p124 = scmp.ne.s32.totalorder %s109, %s123
      %p125 = scmp.eq.s32.totalorder %s24, 0
      %p126 = por %p124, %p125
      %s128 = sadd.s32 %s127, 1
      %p131 = scmp.eq.s32.totalorder %s18, 3
      %p132 = scmp.ne.s32.totalorder %s127, %s129
      %p133 = scmp.eq.s32.totalorder %s18, 0
      %p134 = por %p132, %p133
      %p135 = scmp.ne.s32.totalorder %s127, %s129
      %p136 = scmp.eq.s32.totalorder %s23, 3
      %p137 = por %p135, %p136
      %p138 = scmp.ne.s32.totalorder %s129, %s130
      %p139 = scmp.eq.s32.totalorder %s23, 0
      %p140 = por %p138, %p139
      %p141 = scmp.ne.s32.totalorder %s129, %s130
      %p142 = scmp.eq.s32.totalorder %s24, 3
      %p143 = por %p141, %p142
      %p145 = scmp.ne.s32.totalorder %s130, %s144
      %p146 = scmp.eq.s32.totalorder %s24, 0
      %p147 = por %p145, %p146
      %s148 = ssub.s32 %s26, %s33
      %p149 = scmp.eq.s32.totalorder %s148, 0
      %s151 = sadd.s32 %s150, 1
      %s152 = scalar_select %p149, %s150, %s151
      %p155 = pneg %p149
      %p156 = scmp.eq.s32.totalorder %s18, 3
      %p157 = por %p155, %p156
      %p158 = scmp.ne.s32.totalorder %s150, %s153
      %p159 = scmp.eq.s32.totalorder %s18, 0
      %p160 = por %p158, %p159
      %p161 = scmp.ne.s32.totalorder %s150, %s153
      %p162 = scmp.eq.s32.totalorder %s23, 3
      %p163 = por %p161, %p162
      %p164 = scmp.ne.s32.totalorder %s153, %s154
      %p165 = scmp.eq.s32.totalorder %s23, 0
      %p166 = por %p164, %p165
      %p167 = scmp.ne.s32.totalorder %s153, %s154
      %p168 = scmp.eq.s32.totalorder %s24, 3
      %p169 = por %p167, %p168
      %p171 = scmp.ne.s32.totalorder %s154, %s170
      %p172 = scmp.eq.s32.totalorder %s24, 0
      %p173 = por %p171, %p172
      %s175 = sadd.s32 %s174, 1
      %p178 = scmp.eq.s32.totalorder %s18, 3
      %p179 = scmp.ne.s32.totalorder %s174, %s176
      %p180 = scmp.eq.s32.totalorder %s18, 0
      %p181 = por %p179, %p180
      %p182 = scmp.ne.s32.totalorder %s174, %s176
      %p183 = scmp.eq.s32.totalorder %s23, 3
      %p184 = por %p182, %p183
      %p185 = scmp.ne.s32.totalorder %s176, %s177
      %p186 = scmp.eq.s32.totalorder %s23, 0
      %p187 = por %p185, %p186
      %p188 = scmp.ne.s32.totalorder %s176, %s177
      %p189 = scmp.eq.s32.totalorder %s24, 3
      %p190 = por %p188, %p189
      %p192 = scmp.ne.s32.totalorder %s177, %s191
      %p193 = scmp.eq.s32.totalorder %s24, 0
      %p194 = por %p192, %p193
      %s196 = sadd.s32 %s195, 1
      %p199 = scmp.eq.s32.totalorder %s18, 3
      %p200 = scmp.ne.s32.totalorder %s195, %s197
      %p201 = scmp.eq.s32.totalorder %s18, 0
      %p202 = por %p200, %p201
      %p203 = scmp.ne.s32.totalorder %s195, %s197
      %p204 = scmp.eq.s32.totalorder %s23, 3
      %p205 = por %p203, %p204
      %p206 = scmp.ne.s32.totalorder %s197, %s198
      %p207 = scmp.eq.s32.totalorder %s23, 0
      %p208 = por %p206, %p207
      %p209 = scmp.ne.s32.totalorder %s197, %s198
      %p210 = scmp.eq.s32.totalorder %s24, 3
      %p211 = por %p209, %p210
      %p213 = scmp.ne.s32.totalorder %s198, %s212
      %p214 = scmp.eq.s32.totalorder %s24, 0
      %p215 = por %p213, %p214
      %s217 = sadd.s32 %s216, 1
      %p220 = scmp.eq.s32.totalorder %s18, 3
      %p221 = scmp.ne.s32.totalorder %s216, %s218
      %p222 = scmp.eq.s32.totalorder %s18, 0
      %p223 = por %p221, %p222
      %p224 = scmp.ne.s32.totalorder %s216, %s218
      %p225 = scmp.eq.s32.totalorder %s23, 3
      %p226 = por %p224, %p225
      %p227 = scmp.ne.s32.totalorder %s218, %s219
      %p228 = scmp.eq.s32.totalorder %s23, 0
      %p229 = por %p227, %p228
      %p230 = scmp.ne.s32.totalorder %s218, %s219
      %p231 = scmp.eq.s32.totalorder %s24, 3
      %p232 = por %p230, %p231
      %p234 = scmp.ne.s32.totalorder %s219, %s233
      %p235 = scmp.eq.s32.totalorder %s24, 0
      %p236 = por %p234, %p235
      %s237 = ssub.s32 %s25, %s37
      %s238 = ssub.s32 %s26, %s33
      %s239 = sor.u32 %s237, %s238
      %p240 = scmp.eq.s32.totalorder %s239, 0
      %s242 = sadd.s32 %s241, 1
      %s243 = scalar_select %p240, %s241, %s242
      %p246 = pneg %p240
      %p247 = scmp.eq.s32.totalorder %s18, 3
      %p248 = por %p246, %p247
      %p249 = scmp.ne.s32.totalorder %s241, %s244
      %p250 = scmp.eq.s32.totalorder %s18, 0
      %p251 = por %p249, %p250
      %p252 = scmp.ne.s32.totalorder %s241, %s244
      %p253 = scmp.eq.s32.totalorder %s23, 3
      %p254 = por %p252, %p253
      %p255 = scmp.ne.s32.totalorder %s244, %s245
      %p256 = scmp.eq.s32.totalorder %s23, 0
      %p257 = por %p255, %p256
      %p258 = scmp.ne.s32.totalorder %s244, %s245
      %p259 = scmp.eq.s32.totalorder %s24, 3
      %p260 = por %p258, %p259
      %p262 = scmp.ne.s32.totalorder %s245, %s261
      %p263 = scmp.eq.s32.totalorder %s24, 0
      %p264 = por %p262, %p263
      %p265 = scmp.le.s32.totalorder 1, %s18
      %p266 = scmp.lt.s32.totalorder %s18, 5
      %p267 = pnand %p265, %p266
      %p268 = pneg %p267
      // Predicated region
      $region9: #{tpu_custom_call.1} parent=5 // pred_check
        _
      $region10: #{tpu_custom_call.1} parent=5 // pred_check_branch
        %270 = sbr.rel (%p267) target = $region12
      $region11: #{tpu_custom_call.1} parent=5 // pred_region
        %s271 = ssub.s32 %s18, 1
        // Predicated region
        $region13: #{tpu_custom_call.1} parent=11 // pred_check
          %p272 = pneg %p77
        $region14: #{tpu_custom_call.1} parent=11 // pred_check_branch
          %274 = sbr.rel (%p272) target = $region16
        $region15: #{tpu_custom_call.1} parent=11 // pred_region
          _
        $region16: #{tpu_custom_call.1} parent=11 // pred_fallthru
          _
        // Predicated region
        $region17: #{tpu_custom_call.1} parent=11 // pred_check
          %p275 = pneg %p98
        $region18: #{tpu_custom_call.1} parent=11 // pred_check_branch
          %277 = sbr.rel (%p275) target = $region20
        $region19: #{tpu_custom_call.1} parent=11 // pred_region
          _
        $region20: #{tpu_custom_call.1} parent=11 // pred_fallthru
          _
        // Predicated region
        $region21: #{tpu_custom_call.1} parent=11 // pred_check
          %p278 = pneg %p119
        $region22: #{tpu_custom_call.1} parent=11 // pred_check_branch
          %280 = sbr.rel (%p278) target = $region24
        $region23: #{tpu_custom_call.1} parent=11 // pred_region
          _
        $region24: #{tpu_custom_call.1} parent=11 // pred_fallthru
          _
        // Predicated region
        $region25: #{tpu_custom_call.1} parent=11 // pred_check
          %p281 = pneg %p140
        $region26: #{tpu_custom_call.1} parent=11 // pred_check_branch
          %283 = sbr.rel (%p281) target = $region28
        $region27: #{tpu_custom_call.1} parent=11 // pred_region
          _
        $region28: #{tpu_custom_call.1} parent=11 // pred_fallthru
          _
        // Predicated region
        $region29: #{tpu_custom_call.1} parent=11 // pred_check
          %p284 = pneg %p187
        $region30: #{tpu_custom_call.1} parent=11 // pred_check_branch
          %286 = sbr.rel (%p284) target = $region32
        $region31: #{tpu_custom_call.1} parent=11 // pred_region
          _
        $region32: #{tpu_custom_call.1} parent=11 // pred_fallthru
          _
        // Predicated region
        $region33: #{tpu_custom_call.1} parent=11 // pred_check
          %p287 = pneg %p208
        $region34: #{tpu_custom_call.1} parent=11 // pred_check_branch
          %289 = sbr.rel (%p287) target = $region36
        $region35: #{tpu_custom_call.1} parent=11 // pred_region
          _
        $region36: #{tpu_custom_call.1} parent=11 // pred_fallthru
          _
        // Predicated region
        $region37: #{tpu_custom_call.1} parent=11 // pred_check
          %p290 = pneg %p229
        $region38: #{tpu_custom_call.1} parent=11 // pred_check_branch
          %292 = sbr.rel (%p290) target = $region40
        $region39: #{tpu_custom_call.1} parent=11 // pred_region
          _
        $region40: #{tpu_custom_call.1} parent=11 // pred_fallthru
          _
      $region12: #{tpu_custom_call.1} parent=5 // pred_fallthru
        _
      %p293 = scmp.lt.s32.totalorder %s18, 4
      // Predicated region
      $region41: #{tpu_custom_call.1} parent=5 // pred_check
        %p294 = pneg %p293
      $region42: #{tpu_custom_call.1} parent=5 // pred_check_branch
        %296 = sbr.rel (%p294) target = $region44
      $region43: #{tpu_custom_call.1} parent=5 // pred_region
        // Predicated region
        $region45: #{tpu_custom_call.1} parent=43 // pred_check
          %p297 = pneg %p50
        $region46: #{tpu_custom_call.1} parent=43 // pred_check_branch
          %299 = sbr.rel (%p297) target = $region48
        $region47: #{tpu_custom_call.1} parent=43 // pred_region
          %p300 = scmp.lt.s32.totalorder %s25, 1
          %s301 = scalar_select %p300, %s25, 1
          %s302 = smul.addr %s301, 8
          %s303 = smul.addr %s302, 2
          %s304 = scalar_lea.vmem %s0, %s303
        $region48: #{tpu_custom_call.1} parent=43 // pred_fallthru
          _
        // Predicated region
        $region49: #{tpu_custom_call.1} parent=43 // pred_check
          %p305 = pneg %p160
        $region50: #{tpu_custom_call.1} parent=43 // pred_check_branch
          %307 = sbr.rel (%p305) target = $region52
        $region51: #{tpu_custom_call.1} parent=43 // pred_region
          %s308 = sand.u32 %s150, 1
          %s309 = sand.u32 %s150, 1
          %s310 = smul.addr %s309, 112
          %s311 = scalar_lea.vmem [#allocation3], %s310
          %s312 = smul.u32 4, %s26
          %s313 = smul.addr %s312, 4
          %s314 = scalar_lea.vmem %s5, %s313
          // Predicated region
          $region53: #{tpu_custom_call.1} parent=51 // pred_check
            _
          $region54: #{tpu_custom_call.1} parent=51 // pred_check_branch
            %316 = sbr.rel (0) target = $region56
          $region55: #{tpu_custom_call.1} parent=51 // pred_region
            // Predicated region
            $region57: #{tpu_custom_call.1} parent=55 // pred_check
              _
            $region58: #{tpu_custom_call.1} parent=55 // pred_check_branch
              %318 = sbr.rel (0) target = $region60
            $region59: #{tpu_custom_call.1} parent=55 // pred_region
              loop: start=0, step=1, limit=1
              $region61: #{tpu_custom_call.1} parent=59 // loop_pre_header
                _
              $region62: #{tpu_custom_call.1} parent=59 // loop_header
                %s320 = sphi 0, %s324
                %p321 = scmp.ge.s32.totalorder %s320, 1
                %s325 = sphi %s314, %s314
                %s326 = sphi %s311, %s311
              $region63: #{tpu_custom_call.1} parent=59 // loop_header_branch
                %323 = sbr.rel (%p321) target = $region67
              $region64: #{tpu_custom_call.1} parent=59 // loop_body
                %v327 = vld [vmem:[%s325] sm:$0xff]
                %328 = vst [vmem:[%s326] sm:$0xff] %v327
                %v329 = vld [vmem:[%s325 + $0x8] sm:$0xff]
                %330 = vst [vmem:[%s326 + $0x8] sm:$0xff] %v329
                %v331 = vld [vmem:[%s325 + $0x20] sm:$0xff]
                %332 = vst [vmem:[%s326 + $0x10] sm:$0xff] %v331
                %v333 = vld [vmem:[%s325 + $0x28] sm:$0xff]
                %334 = vst [vmem:[%s326 + $0x18] sm:$0xff] %v333
                %v335 = vld [vmem:[%s325 + $0x40] sm:$0xff]
                %336 = vst [vmem:[%s326 + $0x20] sm:$0xff] %v335
                %v337 = vld [vmem:[%s325 + $0x48] sm:$0xff]
                %338 = vst [vmem:[%s326 + $0x28] sm:$0xff] %v337
                %v339 = vld [vmem:[%s325 + $0x60] sm:$0xff]
                %340 = vst [vmem:[%s326 + $0x30] sm:$0xff] %v339
                %v341 = vld [vmem:[%s325 + $0x68] sm:$0xff]
                %342 = vst [vmem:[%s326 + $0x38] sm:$0xff] %v341
                %v343 = vld [vmem:[%s325 + $0x80] sm:$0xff]
                %344 = vst [vmem:[%s326 + $0x40] sm:$0xff] %v343
                %v345 = vld [vmem:[%s325 + $0x88] sm:$0xff]
                %346 = vst [vmem:[%s326 + $0x48] sm:$0xff] %v345
                %v347 = vld [vmem:[%s325 + $0xa0] sm:$0xff]
                %348 = vst [vmem:[%s326 + $0x50] sm:$0xff] %v347
                %v349 = vld [vmem:[%s325 + $0xa8] sm:$0xff]
                %350 = vst [vmem:[%s326 + $0x58] sm:$0xff] %v349
                %v351 = vld [vmem:[%s325 + $0xc0] sm:$0xff]
                %352 = vst [vmem:[%s326 + $0x60] sm:$0xff] %v351
                %v353 = vld [vmem:[%s325 + $0xc8] sm:$0xff]
                %354 = vst [vmem:[%s326 + $0x68] sm:$0xff] %v353
              $region65: #{tpu_custom_call.1} parent=59 // loop_footer
                %s324 = sadd.s32 1, %s320
              $region66: #{tpu_custom_call.1} parent=59 // loop_footer_branch
                %319 = sbr.rel target = $region62
              $region67: #{tpu_custom_call.1} parent=59 // loop_exit
                _
            $region60: #{tpu_custom_call.1} parent=55 // pred_fallthru
              _
            // Predicated region
            $region68: #{tpu_custom_call.1} parent=55 // pred_check
              _
            $region69: #{tpu_custom_call.1} parent=55 // pred_check_branch
              %356 = sbr.rel target = $region71
            $region70: #{tpu_custom_call.1} parent=55 // pred_region
              _
            $region71: #{tpu_custom_call.1} parent=55 // pred_fallthru
              _
          $region56: #{tpu_custom_call.1} parent=51 // pred_fallthru
            _
          %357 = vnop
        $region52: #{tpu_custom_call.1} parent=43 // pred_fallthru
          _
      $region44: #{tpu_custom_call.1} parent=5 // pred_fallthru
        _
      %p358 = scmp.le.s32.totalorder 1, %s18
      %p359 = scmp.lt.s32.totalorder %s18, 5
      %p360 = pnand %p358, %p359
      %p361 = pneg %p360
      // Predicated region
      $region72: #{tpu_custom_call.1} parent=5 // pred_check
        _
      $region73: #{tpu_custom_call.1} parent=5 // pred_check_branch
        %363 = sbr.rel (%p360) target = $region75
      $region74: #{tpu_custom_call.1} parent=5 // pred_region
        %s364 = ssub.s32 %s18, 1
        %s365 = sand.u32 %s153, 1
        %s366 = sand.u32 %s153, 1
        %s367 = smul.addr %s366, 112
        %s368 = scalar_lea.vmem [#allocation3], %s367
        // Predicated region
        $region76: #{tpu_custom_call.1} parent=74 // pred_check
          %p369 = pneg %p166
        $region77: #{tpu_custom_call.1} parent=74 // pred_check_branch
          %371 = sbr.rel (%p369) target = $region79
        $region78: #{tpu_custom_call.1} parent=74 // pred_region
          _
        $region79: #{tpu_custom_call.1} parent=74 // pred_fallthru
          _
        %p372 = scmp.lt.s32.totalorder %s27, 1
        %s373 = scalar_select %p372, %s27, 1
        %s374 = smul.addr %s373, 8
        %s375 = smul.addr %s374, 2
        %s376 = scalar_lea.vmem %s0, %s375
        %p377 = pneg %p56
        %p378 = pneg %p53
        %p379 = pneg %p77
        %p380 = pneg %p74
        %p381 = pneg %p98
        %p382 = pneg %p95
        %p383 = pneg %p119
        %p384 = pneg %p116
        %p385 = pneg %p140
        %p386 = pneg %p137
        %s387 = sand.u32 %s153, 1
        %s388 = sand.u32 %s153, 1
        %s389 = smul.addr %s388, 112
        %s390 = scalar_lea.vmem [#allocation3], %s389
        %p391 = pneg %p166
        %p392 = pneg %p163
        %p393 = pneg %p187
        %p394 = pneg %p184
        %p395 = pneg %p208
        %p396 = pneg %p205
        %p397 = pneg %p229
        %p398 = pneg %p226
        %p399 = pneg %p257
        %p400 = pneg %p254
        %s401 = sand.u32 %s244, 1
        %s402 = scalar_lea.sflag [#allocation5], %s401
        %s403 = sand.u32 %s244, 1
        %s404 = smul.addr %s403, 32
        %s405 = scalar_lea.vmem [#allocation4], %s404
        %p406 = scmp.lt.s32.totalorder %s27, 1
        %s407 = scalar_select %p406, %s27, 1
        %s408 = smul.addr %s407, 8
        %s409 = smul.addr %s408, 2
        %s410 = scalar_lea.vmem %s0, %s409
        %s411 = smul.u32 4, %s28
        %s412 = smul.u32 4, %s28
        %p414 = scmp.eq.s32.totalorder %s28, 0
        // Predicated region
        $region80: #{tpu_custom_call.1} parent=74 // pred_check
          %p415 = pneg %p414
        $region81: #{tpu_custom_call.1} parent=74 // pred_check_branch
          %417 = sbr.rel (%p415) target = $region83
        $region82: #{tpu_custom_call.1} parent=74 // pred_region
          %v418 = vld [vmem:[%s410] sm:$0xff]
          %v419 = vld [vmem:[%s410 + $0x8] sm:$0xff]
          %v420 = vld [vmem:[%s1] sm:$0xf]
          %v421 = vld [vmem:[%s1 + $0x4] sm:$0xf]
          %v422 = vld [vmem:[%s1 + $0x8] sm:$0xf]
          %v423 = vld [vmem:[%s1 + $0xc] sm:$0xf]
          %v424 = vld [vmem:[%s1 + $0x10] sm:$0xf]
          %v425 = vld [vmem:[%s1 + $0x14] sm:$0xf]
          %v426 = vld [vmem:[%s1 + $0x18] sm:$0xf]
          %v427 = vld [vmem:[%s1 + $0x1c] sm:$0xf]
          %v428 = vld [vmem:[%s1 + $0x20] sm:$0xf]
          %v429 = vld [vmem:[%s1 + $0x24] sm:$0xf]
          %v430 = vld [vmem:[%s1 + $0x28] sm:$0xf]
          %v431 = vld [vmem:[%s1 + $0x2c] sm:$0xf]
          %v432 = vld [vmem:[%s1 + $0x30] sm:$0xf]
          %v433 = vld [vmem:[%s1 + $0x34] sm:$0xf]
          %v434 = vld [vmem:[%s1 + $0x38] sm:$0xf]
          %v435 = vld [vmem:[%s1 + $0x3c] sm:$0xf]
          %v436 = vld [vmem:[%s1 + $0x40] sm:$0xf]
          %v437 = vld [vmem:[%s1 + $0x44] sm:$0xf]
          %v438 = vld [vmem:[%s1 + $0x48] sm:$0xf]
          %v439 = vld [vmem:[%s1 + $0x4c] sm:$0xf]
          %v440 = vld [vmem:[%s1 + $0x50] sm:$0xf]
          %v441 = vld [vmem:[%s1 + $0x54] sm:$0xf]
          %v442 = vld [vmem:[%s1 + $0x58] sm:$0xf]
          %v443 = vld [vmem:[%s1 + $0x5c] sm:$0xf]
          %v444 = vld [vmem:[%s1 + $0x60] sm:$0xf]
          %v445 = vld [vmem:[%s1 + $0x64] sm:$0xf]
          %v446 = vld [vmem:[%s1 + $0x68] sm:$0xf]
          %v447 = vld [vmem:[%s1 + $0x6c] sm:$0xf]
          %v448 = vld [vmem:[%s1 + $0x70] sm:$0xf]
          %v449 = vld [vmem:[%s1 + $0x74] sm:$0xf]
          %v450 = vld [vmem:[%s1 + $0x78] sm:$0xf]
          %v451 = vld [vmem:[%s1 + $0x7c] sm:$0xf]
          %v452 = vld [vmem:[%s1 + $0x80] sm:$0xf]
          %v453 = vld [vmem:[%s1 + $0x84] sm:$0xf]
          %v454 = vld [vmem:[%s1 + $0x88] sm:$0xf]
          %v455 = vld [vmem:[%s1 + $0x8c] sm:$0xf]
          %v456 = vld [vmem:[%s1 + $0x90] sm:$0xf]
          %v457 = vld [vmem:[%s1 + $0x94] sm:$0xf]
          %v458 = vld [vmem:[%s1 + $0x98] sm:$0xf]
          %v459 = vld [vmem:[%s1 + $0x9c] sm:$0xf]
          %v460 = vld [vmem:[%s1 + $0xa0] sm:$0xf]
          %v461 = vld [vmem:[%s1 + $0xa4] sm:$0xf]
          %v462 = vld [vmem:[%s1 + $0xa8] sm:$0xf]
          %v463 = vld [vmem:[%s1 + $0xac] sm:$0xf]
          %v464 = vld [vmem:[%s1 + $0xb0] sm:$0xf]
          %v465 = vld [vmem:[%s1 + $0xb4] sm:$0xf]
          %v466 = vld [vmem:[%s1 + $0xb8] sm:$0xf]
          %v467 = vld [vmem:[%s1 + $0xbc] sm:$0xf]
          %v468 = vld [vmem:[%s1 + $0xc0] sm:$0xf]
          %v469 = vld [vmem:[%s1 + $0xc4] sm:$0xf]
          %v470 = vld [vmem:[%s1 + $0xc8] sm:$0xf]
          %v471 = vld [vmem:[%s1 + $0xcc] sm:$0xf]
          %v472 = vld [vmem:[%s1 + $0xd0] sm:$0xf]
          %v473 = vld [vmem:[%s1 + $0xd4] sm:$0xf]
          %v474 = vld [vmem:[%s1 + $0xd8] sm:$0xf]
          %v475 = vld [vmem:[%s1 + $0xdc] sm:$0xf]
          %v476 = vld [vmem:[%s1 + $0xe0] sm:$0xf]
          %v477 = vld [vmem:[%s1 + $0xe4] sm:$0xf]
          %v478 = vld [vmem:[%s1 + $0xe8] sm:$0xf]
          %v479 = vld [vmem:[%s1 + $0xec] sm:$0xf]
          %v480 = vld [vmem:[%s1 + $0xf0] sm:$0xf]
          %v481 = vld [vmem:[%s1 + $0xf4] sm:$0xf]
          %v482 = vld [vmem:[%s1 + $0xf8] sm:$0xf]
          %v483 = vld [vmem:[%s1 + $0xfc] sm:$0xf]
          %v484 = vld [vmem:[%s1 + $0x100] sm:$0xf]
          %v485 = vld [vmem:[%s1 + $0x104] sm:$0xf]
          %v486 = vld [vmem:[%s1 + $0x108] sm:$0xf]
          %v487 = vld [vmem:[%s1 + $0x10c] sm:$0xf]
          %v488 = vld [vmem:[%s1 + $0x110] sm:$0xf]
          %v489 = vld [vmem:[%s1 + $0x114] sm:$0xf]
          %v490 = vld [vmem:[%s1 + $0x118] sm:$0xf]
          %v491 = vld [vmem:[%s1 + $0x11c] sm:$0xf]
          %v492 = vld [vmem:[%s1 + $0x120] sm:$0xf]
          %v493 = vld [vmem:[%s1 + $0x124] sm:$0xf]
          %v494 = vld [vmem:[%s1 + $0x128] sm:$0xf]
          %v495 = vld [vmem:[%s1 + $0x12c] sm:$0xf]
          %v496 = vld [vmem:[%s1 + $0x130] sm:$0xf]
          %v497 = vld [vmem:[%s1 + $0x134] sm:$0xf]
          %v498 = vld [vmem:[%s1 + $0x138] sm:$0xf]
          %v499 = vld [vmem:[%s1 + $0x13c] sm:$0xf]
          %v500 = vld [vmem:[%s1 + $0x140] sm:$0xf]
          %v501 = vld [vmem:[%s1 + $0x144] sm:$0xf]
          %v502 = vld [vmem:[%s1 + $0x148] sm:$0xf]
          %v503 = vld [vmem:[%s1 + $0x14c] sm:$0xf]
          %v504 = vld [vmem:[%s1 + $0x150] sm:$0xf]
          %v505 = vld [vmem:[%s1 + $0x154] sm:$0xf]
          %v506 = vld [vmem:[%s1 + $0x158] sm:$0xf]
          %v507 = vld [vmem:[%s1 + $0x15c] sm:$0xf]
          %v508 = vld [vmem:[%s1 + $0x160] sm:$0xf]
          %v509 = vld [vmem:[%s1 + $0x164] sm:$0xf]
          %v510 = vld [vmem:[%s1 + $0x168] sm:$0xf]
          %v511 = vld [vmem:[%s1 + $0x16c] sm:$0xf]
          %v512 = vld [vmem:[%s1 + $0x170] sm:$0xf]
          %v513 = vld [vmem:[%s1 + $0x174] sm:$0xf]
          %v514 = vld [vmem:[%s1 + $0x178] sm:$0xf]
          %v515 = vld [vmem:[%s1 + $0x17c] sm:$0xf]
          %v516 = vld [vmem:[%s1 + $0x180] sm:$0xf]
          %v517 = vld [vmem:[%s1 + $0x184] sm:$0xf]
          %v518 = vld [vmem:[%s1 + $0x188] sm:$0xf]
          %v519 = vld [vmem:[%s1 + $0x18c] sm:$0xf]
          %v520 = vld [vmem:[%s1 + $0x190] sm:$0xf]
          %v521 = vld [vmem:[%s1 + $0x194] sm:$0xf]
          %v522 = vld [vmem:[%s1 + $0x198] sm:$0xf]
          %v523 = vld [vmem:[%s1 + $0x19c] sm:$0xf]
          %v524 = vld [vmem:[%s1 + $0x1a0] sm:$0xf]
          %v525 = vld [vmem:[%s1 + $0x1a4] sm:$0xf]
          %v526 = vld [vmem:[%s1 + $0x1a8] sm:$0xf]
          %v527 = vld [vmem:[%s1 + $0x1ac] sm:$0xf]
          %v528 = vld [vmem:[%s1 + $0x1b0] sm:$0xf]
          %v529 = vld [vmem:[%s1 + $0x1b4] sm:$0xf]
          %v530 = vld [vmem:[%s1 + $0x1b8] sm:$0xf]
          %v531 = vld [vmem:[%s1 + $0x1bc] sm:$0xf]
          %v532 = vld [vmem:[%s1 + $0x1c0] sm:$0xf]
          %v533 = vld [vmem:[%s1 + $0x1c4] sm:$0xf]
          %v534 = vld [vmem:[%s1 + $0x1c8] sm:$0xf]
          %v535 = vld [vmem:[%s1 + $0x1cc] sm:$0xf]
          %v536 = vld [vmem:[%s1 + $0x1d0] sm:$0xf]
          %v537 = vld [vmem:[%s1 + $0x1d4] sm:$0xf]
          %v538 = vld [vmem:[%s1 + $0x1d8] sm:$0xf]
          %v539 = vld [vmem:[%s1 + $0x1dc] sm:$0xf]
          %v540 = vld [vmem:[%s1 + $0x1e0] sm:$0xf]
          %v541 = vld [vmem:[%s1 + $0x1e4] sm:$0xf]
          %v542 = vld [vmem:[%s1 + $0x1e8] sm:$0xf]
          %v543 = vld [vmem:[%s1 + $0x1ec] sm:$0xf]
          %v544 = vld [vmem:[%s1 + $0x1f0] sm:$0xf]
          %v545 = vld [vmem:[%s1 + $0x1f4] sm:$0xf]
          %v546 = vld [vmem:[%s1 + $0x1f8] sm:$0xf]
          %v547 = vld [vmem:[%s1 + $0x1fc] sm:$0xf]
          %549 = vst [vmem:[#allocation1] ss:$4 sm:$0xff] %v418
          %s551 = scalar_lea.vmem [#allocation1], 32
          %552 = vst [vmem:[%s551] ss:$4 sm:$0xff] %v419
          %v553 = vld.sshfl [vmem:[#allocation1] sm:$0xff pattern:$0x73625140]
          %v554 = vld.sshfl [vmem:[#allocation1 + $0x8] sm:$0xff pattern:$0x73625140]
          %v555 = vld.sshfl [vmem:[#allocation1 + $0x10] sm:$0xff pattern:$0x73625140]
          %v556 = vld.sshfl [vmem:[#allocation1 + $0x18] sm:$0xff pattern:$0x73625140]
          %v557 = vld.sshfl [vmem:[#allocation1 + $0x20] sm:$0xff pattern:$0x73625140]
          %v558 = vld.sshfl [vmem:[#allocation1 + $0x28] sm:$0xff pattern:$0x73625140]
          %v559 = vld.sshfl [vmem:[#allocation1 + $0x30] sm:$0xff pattern:$0x73625140]
          %v560 = vld.sshfl [vmem:[#allocation1 + $0x38] sm:$0xff pattern:$0x73625140]
          %v697 = vunpack.c.l.b16 %v420
          %v698 = vunpack.c.l.b16 %v421
          %v699 = vunpack.c.l.b16 %v422
          %v700 = vunpack.c.l.b16 %v423
          %v701 = vunpack.c.l.b16 %v424
          %v702 = vunpack.c.l.b16 %v425
          %v703 = vunpack.c.l.b16 %v426
          %v704 = vunpack.c.l.b16 %v427
          %v705 = vunpack.c.l.b16 %v428
          %v706 = vunpack.c.l.b16 %v429
          %v707 = vunpack.c.l.b16 %v430
          %v708 = vunpack.c.l.b16 %v431
          %v709 = vunpack.c.l.b16 %v432
          %v710 = vunpack.c.l.b16 %v433
          %v711 = vunpack.c.l.b16 %v434
          %v712 = vunpack.c.l.b16 %v435
          %v713 = vunpack.c.l.b16 %v436
          %v714 = vunpack.c.l.b16 %v437
          %v715 = vunpack.c.l.b16 %v438
          %v716 = vunpack.c.l.b16 %v439
          %v717 = vunpack.c.l.b16 %v440
          %v718 = vunpack.c.l.b16 %v441
          %v719 = vunpack.c.l.b16 %v442
          %v720 = vunpack.c.l.b16 %v443
          %v721 = vunpack.c.l.b16 %v444
          %v722 = vunpack.c.l.b16 %v445
          %v723 = vunpack.c.l.b16 %v446
          %v724 = vunpack.c.l.b16 %v447
          %v725 = vunpack.c.l.b16 %v448
          %v726 = vunpack.c.l.b16 %v449
          %v727 = vunpack.c.l.b16 %v450
          %v728 = vunpack.c.l.b16 %v451
          %v729 = vunpack.c.l.b16 %v452
          %v730 = vunpack.c.l.b16 %v453
          %v731 = vunpack.c.l.b16 %v454
          %v732 = vunpack.c.l.b16 %v455
          %v733 = vunpack.c.l.b16 %v456
          %v734 = vunpack.c.l.b16 %v457
          %v735 = vunpack.c.l.b16 %v458
          %v736 = vunpack.c.l.b16 %v459
          %v737 = vunpack.c.l.b16 %v460
          %v738 = vunpack.c.l.b16 %v461
          %v739 = vunpack.c.l.b16 %v462
          %v740 = vunpack.c.l.b16 %v463
          %v741 = vunpack.c.l.b16 %v464
          %v742 = vunpack.c.l.b16 %v465
          %v743 = vunpack.c.l.b16 %v466
          %v744 = vunpack.c.l.b16 %v467
          %v745 = vunpack.c.l.b16 %v468
          %v746 = vunpack.c.l.b16 %v469
          %v747 = vunpack.c.l.b16 %v470
          %v748 = vunpack.c.l.b16 %v471
          %v749 = vunpack.c.l.b16 %v472
          %v750 = vunpack.c.l.b16 %v473
          %v751 = vunpack.c.l.b16 %v474
          %v752 = vunpack.c.l.b16 %v475
          %v753 = vunpack.c.l.b16 %v476
          %v754 = vunpack.c.l.b16 %v477
          %v755 = vunpack.c.l.b16 %v478
          %v756 = vunpack.c.l.b16 %v479
          %v757 = vunpack.c.l.b16 %v480
          %v758 = vunpack.c.l.b16 %v481
          %v759 = vunpack.c.l.b16 %v482
          %v760 = vunpack.c.l.b16 %v483
          %v761 = vunpack.c.l.b16 %v484
          %v762 = vunpack.c.l.b16 %v485
          %v763 = vunpack.c.l.b16 %v486
          %v764 = vunpack.c.l.b16 %v487
          %v765 = vunpack.c.l.b16 %v488
          %v766 = vunpack.c.l.b16 %v489
          %v767 = vunpack.c.l.b16 %v490
          %v768 = vunpack.c.l.b16 %v491
          %v769 = vunpack.c.l.b16 %v492
          %v770 = vunpack.c.l.b16 %v493
          %v771 = vunpack.c.l.b16 %v494
          %v772 = vunpack.c.l.b16 %v495
          %v773 = vunpack.c.l.b16 %v496
          %v774 = vunpack.c.l.b16 %v497
          %v775 = vunpack.c.l.b16 %v498
          %v776 = vunpack.c.l.b16 %v499
          %v777 = vunpack.c.l.b16 %v500
          %v778 = vunpack.c.l.b16 %v501
          %v779 = vunpack.c.l.b16 %v502
          %v780 = vunpack.c.l.b16 %v503
          %v781 = vunpack.c.l.b16 %v504
          %v782 = vunpack.c.l.b16 %v505
          %v783 = vunpack.c.l.b16 %v506
          %v784 = vunpack.c.l.b16 %v507
          %v785 = vunpack.c.l.b16 %v508
          %v786 = vunpack.c.l.b16 %v509
          %v787 = vunpack.c.l.b16 %v510
          %v788 = vunpack.c.l.b16 %v511
          %v789 = vunpack.c.l.b16 %v512
          %v790 = vunpack.c.l.b16 %v513
          %v791 = vunpack.c.l.b16 %v514
          %v792 = vunpack.c.l.b16 %v515
          %v793 = vunpack.c.l.b16 %v516
          %v794 = vunpack.c.l.b16 %v517
          %v795 = vunpack.c.l.b16 %v518
          %v796 = vunpack.c.l.b16 %v519
          %v797 = vunpack.c.l.b16 %v520
          %v798 = vunpack.c.l.b16 %v521
          %v799 = vunpack.c.l.b16 %v522
          %v800 = vunpack.c.l.b16 %v523
          %v801 = vunpack.c.l.b16 %v524
          %v802 = vunpack.c.l.b16 %v525
          %v803 = vunpack.c.l.b16 %v526
          %v804 = vunpack.c.l.b16 %v527
          %v805 = vunpack.c.l.b16 %v528
          %v806 = vunpack.c.l.b16 %v529
          %v807 = vunpack.c.l.b16 %v530
          %v808 = vunpack.c.l.b16 %v531
          %v809 = vunpack.c.l.b16 %v532
          %v810 = vunpack.c.l.b16 %v533
          %v811 = vunpack.c.l.b16 %v534
          %v812 = vunpack.c.l.b16 %v535
          %v813 = vunpack.c.l.b16 %v536
          %v814 = vunpack.c.l.b16 %v537
          %v815 = vunpack.c.l.b16 %v538
          %v816 = vunpack.c.l.b16 %v539
          %v817 = vunpack.c.l.b16 %v540
          %v818 = vunpack.c.l.b16 %v541
          %v819 = vunpack.c.l.b16 %v542
          %v820 = vunpack.c.l.b16 %v543
          %v821 = vunpack.c.l.b16 %v544
          %v822 = vunpack.c.l.b16 %v545
          %v823 = vunpack.c.l.b16 %v546
          %v824 = vunpack.c.l.b16 %v547
          %v825 = vpack.c.b16 %v698, %v697
          %v826 = vpack.c.b16 %v700, %v699
          %v827 = vpack.c.b16 %v702, %v701
          %v828 = vpack.c.b16 %v704, %v703
          %v829 = vpack.c.b16 %v706, %v705
          %v830 = vpack.c.b16 %v708, %v707
          %v831 = vpack.c.b16 %v710, %v709
          %v832 = vpack.c.b16 %v712, %v711
          %v833 = vpack.c.b16 %v714, %v713
          %v834 = vpack.c.b16 %v716, %v715
          %v835 = vpack.c.b16 %v718, %v717
          %v836 = vpack.c.b16 %v720, %v719
          %v837 = vpack.c.b16 %v722, %v721
          %v838 = vpack.c.b16 %v724, %v723
          %v839 = vpack.c.b16 %v726, %v725
          %v840 = vpack.c.b16 %v728, %v727
          %v841 = vpack.c.b16 %v730, %v729
          %v842 = vpack.c.b16 %v732, %v731
          %v843 = vpack.c.b16 %v734, %v733
          %v844 = vpack.c.b16 %v736, %v735
          %v845 = vpack.c.b16 %v738, %v737
          %v846 = vpack.c.b16 %v740, %v739
          %v847 = vpack.c.b16 %v742, %v741
          %v848 = vpack.c.b16 %v744, %v743
          %v849 = vpack.c.b16 %v746, %v745
          %v850 = vpack.c.b16 %v748, %v747
          %v851 = vpack.c.b16 %v750, %v749
          %v852 = vpack.c.b16 %v752, %v751
          %v853 = vpack.c.b16 %v754, %v753
          %v854 = vpack.c.b16 %v756, %v755
          %v855 = vpack.c.b16 %v758, %v757
          %v856 = vpack.c.b16 %v760, %v759
          %v857 = vpack.c.b16 %v762, %v761
          %v858 = vpack.c.b16 %v764, %v763
          %v859 = vpack.c.b16 %v766, %v765
          %v860 = vpack.c.b16 %v768, %v767
          %v861 = vpack.c.b16 %v770, %v769
          %v862 = vpack.c.b16 %v772, %v771
          %v863 = vpack.c.b16 %v774, %v773
          %v864 = vpack.c.b16 %v776, %v775
          %v865 = vpack.c.b16 %v778, %v777
          %v866 = vpack.c.b16 %v780, %v779
          %v867 = vpack.c.b16 %v782, %v781
          %v868 = vpack.c.b16 %v784, %v783
          %v869 = vpack.c.b16 %v786, %v785
          %v870 = vpack.c.b16 %v788, %v787
          %v871 = vpack.c.b16 %v790, %v789
          %v872 = vpack.c.b16 %v792, %v791
          %v873 = vpack.c.b16 %v794, %v793
          %v874 = vpack.c.b16 %v796, %v795
          %v875 = vpack.c.b16 %v798, %v797
          %v876 = vpack.c.b16 %v800, %v799
          %v877 = vpack.c.b16 %v802, %v801
          %v878 = vpack.c.b16 %v804, %v803
          %v879 = vpack.c.b16 %v806, %v805
          %v880 = vpack.c.b16 %v808, %v807
          %v881 = vpack.c.b16 %v810, %v809
          %v882 = vpack.c.b16 %v812, %v811
          %v883 = vpack.c.b16 %v814, %v813
          %v884 = vpack.c.b16 %v816, %v815
          %v885 = vpack.c.b16 %v818, %v817
          %v886 = vpack.c.b16 %v820, %v819
          %v887 = vpack.c.b16 %v822, %v821
          %v888 = vpack.c.b16 %v824, %v823
          %953 = vmatpush.bf16.msra.mxu0 %v832
          %954 = vmatpush.bf16.msra.mxu0 %v831
          %955 = vmatpush.bf16.msra.mxu0 %v830
          %956 = vmatpush.bf16.msra.mxu0 %v829
          %957 = vmatpush.bf16.msra.mxu0 %v828
          %958 = vmatpush.bf16.msra.mxu0 %v827
          %959 = vmatpush.bf16.msra.mxu0 %v826
          %960 = vmatpush.bf16.msra.mxu0 %v825
          %961 = vmatmul.bf16.gmra.mxu0 %v553
          %v962 = vpop.f32.mrf.mxu0
          %v963 = vadd.f32 0.0, %v962
          %v964 = vpop.f32.mrf.mxu0
          %965 = vdwg.mxu0
          %966 = vmatpush.bf16.msra.mxu0 %v840
          %967 = vmatpush.bf16.msra.mxu0 %v839
          %968 = vmatpush.bf16.msra.mxu0 %v838
          %969 = vmatpush.bf16.msra.mxu0 %v837
          %970 = vmatpush.bf16.msra.mxu0 %v836
          %971 = vmatpush.bf16.msra.mxu0 %v835
          %972 = vmatpush.bf16.msra.mxu0 %v834
          %973 = vmatpush.bf16.msra.mxu0 %v833
          %974 = vmatmul.bf16.gmra.mxu0 %v554
          %v975 = vpop.f32.mrf.mxu0
          %v976 = vadd.f32 %v963, %v975
          %v977 = vpop.f32.mrf.mxu0
          %978 = vdwg.mxu0
          %979 = vmatpush.bf16.msra.mxu0 %v848
          %980 = vmatpush.bf16.msra.mxu0 %v847
          %981 = vmatpush.bf16.msra.mxu0 %v846
          %982 = vmatpush.bf16.msra.mxu0 %v845
          %983 = vmatpush.bf16.msra.mxu0 %v844
          %984 = vmatpush.bf16.msra.mxu0 %v843
          %985 = vmatpush.bf16.msra.mxu0 %v842
          %986 = vmatpush.bf16.msra.mxu0 %v841
          %987 = vmatmul.bf16.gmra.mxu0 %v555
          %v988 = vpop.f32.mrf.mxu0
          %v989 = vadd.f32 %v976, %v988
          %v990 = vpop.f32.mrf.mxu0
          %991 = vdwg.mxu0
          %992 = vmatpush.bf16.msra.mxu0 %v856
          %993 = vmatpush.bf16.msra.mxu0 %v855
          %994 = vmatpush.bf16.msra.mxu0 %v854
          %995 = vmatpush.bf16.msra.mxu0 %v853
          %996 = vmatpush.bf16.msra.mxu0 %v852
          %997 = vmatpush.bf16.msra.mxu0 %v851
          %998 = vmatpush.bf16.msra.mxu0 %v850
          %999 = vmatpush.bf16.msra.mxu0 %v849
          %1000 = vmatmul.bf16.gmra.mxu0 %v556
          %v1001 = vpop.f32.mrf.mxu0
          %v1002 = vadd.f32 %v989, %v1001
          %v1003 = vpop.f32.mrf.mxu0
          %1004 = vdwg.mxu0
          %1005 = vmatpush.bf16.msra.mxu0 %v864
          %1006 = vmatpush.bf16.msra.mxu0 %v863
          %1007 = vmatpush.bf16.msra.mxu0 %v862
          %1008 = vmatpush.bf16.msra.mxu0 %v861
          %1009 = vmatpush.bf16.msra.mxu0 %v860
          %1010 = vmatpush.bf16.msra.mxu0 %v859
          %1011 = vmatpush.bf16.msra.mxu0 %v858
          %1012 = vmatpush.bf16.msra.mxu0 %v857
          %1013 = vmatmul.bf16.gmra.mxu0 %v557
          %v1014 = vpop.f32.mrf.mxu0
          %v1015 = vadd.f32 %v1002, %v1014
          %v1016 = vpop.f32.mrf.mxu0
          %1017 = vdwg.mxu0
          %1018 = vmatpush.bf16.msra.mxu0 %v872
          %1019 = vmatpush.bf16.msra.mxu0 %v871
          %1020 = vmatpush.bf16.msra.mxu0 %v870
          %1021 = vmatpush.bf16.msra.mxu0 %v869
          %1022 = vmatpush.bf16.msra.mxu0 %v868
          %1023 = vmatpush.bf16.msra.mxu0 %v867
          %1024 = vmatpush.bf16.msra.mxu0 %v866
          %1025 = vmatpush.bf16.msra.mxu0 %v865
          %1026 = vmatmul.bf16.gmra.mxu0 %v558
          %v1027 = vpop.f32.mrf.mxu0
          %v1028 = vadd.f32 %v1015, %v1027
          %v1029 = vpop.f32.mrf.mxu0
          %1030 = vdwg.mxu0
          %1031 = vmatpush.bf16.msra.mxu0 %v880
          %1032 = vmatpush.bf16.msra.mxu0 %v879
          %1033 = vmatpush.bf16.msra.mxu0 %v878
          %1034 = vmatpush.bf16.msra.mxu0 %v877
          %1035 = vmatpush.bf16.msra.mxu0 %v876
          %1036 = vmatpush.bf16.msra.mxu0 %v875
          %1037 = vmatpush.bf16.msra.mxu0 %v874
          %1038 = vmatpush.bf16.msra.mxu0 %v873
          %1039 = vmatmul.bf16.gmra.mxu0 %v559
          %v1040 = vpop.f32.mrf.mxu0
          %v1041 = vadd.f32 %v1028, %v1040
          %v1042 = vpop.f32.mrf.mxu0
          %1043 = vdwg.mxu0
          %1044 = vmatpush.bf16.msra.mxu0 %v888
          %1045 = vmatpush.bf16.msra.mxu0 %v887
          %1046 = vmatpush.bf16.msra.mxu0 %v886
          %1047 = vmatpush.bf16.msra.mxu0 %v885
          %1048 = vmatpush.bf16.msra.mxu0 %v884
          %1049 = vmatpush.bf16.msra.mxu0 %v883
          %1050 = vmatpush.bf16.msra.mxu0 %v882
          %1051 = vmatpush.bf16.msra.mxu0 %v881
          %1052 = vmatmul.bf16.gmra.mxu0 %v560
          %v1053 = vpop.f32.mrf.mxu0
          %v1054 = vadd.f32 %v1041, %v1053
          %v1055 = vpop.f32.mrf.mxu0
          %1056 = vdwg.mxu0
          %v1057 = vld [vmem:[%s2] sm:$0x3]
          %v1058 = vpack.c.bf16 %v1054, %v1054
          %v1059 = vld [vmem:[%s3] sm:$0xf]
          %1061 = vset.pattern.permute.xlu0 0
          %1062 = vperm.xlu0 %1061, %v1059
          %v1063 = vpop.permute.xlu0 %1062
          %vm1065 = vcmask 31744
          %v1067 = vsel %vm1065, %v1057, 0
          %vm1069 = vcmask 1041408
          %v1071 = vsel %vm1069, %v1058, 0
          %1073 = vmatpush.bf16.msra.mxu0 0
          %1074 = vmatpush.bf16.msra.mxu0 0
          %1075 = vmatpush.bf16.msra.mxu0 0
          %1076 = vmatpush.bf16.msra.mxu0 0
          %1077 = vmatpush.bf16.msra.mxu0 0
          %1078 = vmatpush.bf16.msra.mxu0 0
          %1079 = vmatpush.bf16.msra.mxu0 0
          %1080 = vmatpush.bf16.msra.mxu0 %v1071
          %1081 = vmatmul.bf16.gmra.mxu0 %v1067
          %v1082 = vpop.f32.mrf.mxu0
          %v1083 = vadd.f32 %v1063, %v1082
          %v1084 = vpop.f32.mrf.mxu0
          %1085 = vdwg.mxu0
          %v1086 = vmax.f32 %v1083, 0.0
          %v1087 = vld [vmem:[%s4] sm:$0xf]
          %v1088 = vmul.f32 %v1086, %v1087
          %vm1089 = vcmask 404480
          %1090 = vst.msk [vmem:[#allocation2] sm:$0xf] %vm1089, %v1088
        $region83: #{tpu_custom_call.1} parent=74 // pred_fallthru
          _
        %v1091 = vld [vmem:[#allocation2] sm:$0xf]
        %v1092 = vpack.c.bf16 %v1091, %v1091
        %v1093 = vld [vmem:[%s368] sm:$0xff]
        %v1094 = vld [vmem:[%s368 + $0x8] sm:$0xff]
        %v1095 = vld [vmem:[%s368 + $0x10] sm:$0xff]
        %v1096 = vld [vmem:[%s368 + $0x18] sm:$0xff]
        %v1097 = vld [vmem:[%s368 + $0x20] sm:$0xff]
        %v1098 = vld [vmem:[%s368 + $0x28] sm:$0xff]
        %v1099 = vld [vmem:[%s368 + $0x30] sm:$0xff]
        %v1100 = vld [vmem:[%s368 + $0x38] sm:$0xff]
        %v1101 = vld [vmem:[%s368 + $0x40] sm:$0xff]
        %v1102 = vld [vmem:[%s368 + $0x48] sm:$0xff]
        %v1103 = vld [vmem:[%s368 + $0x50] sm:$0xff]
        %v1104 = vld [vmem:[%s368 + $0x58] sm:$0xff]
        %v1105 = vld [vmem:[%s368 + $0x60] sm:$0x11]
        %v1106 = vld [vmem:[%s368 + $0x68] sm:$0x11]
        %v1121 = vunpack.c.l.b16 %v1093
        %v1122 = vunpack.c.h.b16 %v1093
        %v1123 = vunpack.c.l.b16 %v1094
        %v1124 = vunpack.c.h.b16 %v1094
        %v1125 = vunpack.c.l.b16 %v1095
        %v1126 = vunpack.c.h.b16 %v1095
        %v1127 = vunpack.c.l.b16 %v1096
        %v1128 = vunpack.c.h.b16 %v1096
        %v1129 = vunpack.c.l.b16 %v1097
        %v1130 = vunpack.c.h.b16 %v1097
        %v1131 = vunpack.c.l.b16 %v1098
        %v1132 = vunpack.c.h.b16 %v1098
        %v1133 = vunpack.c.l.b16 %v1099
        %v1134 = vunpack.c.h.b16 %v1099
        %v1135 = vunpack.c.l.b16 %v1100
        %v1136 = vunpack.c.h.b16 %v1100
        %v1137 = vunpack.c.l.b16 %v1101
        %v1138 = vunpack.c.h.b16 %v1101
        %v1139 = vunpack.c.l.b16 %v1102
        %v1140 = vunpack.c.h.b16 %v1102
        %v1141 = vunpack.c.l.b16 %v1103
        %v1142 = vunpack.c.h.b16 %v1103
        %v1143 = vunpack.c.l.b16 %v1104
        %v1144 = vunpack.c.h.b16 %v1104
        %v1145 = vunpack.c.l.b16 %v1105
        %v1146 = vunpack.c.h.b16 %v1105
        %v1147 = vunpack.c.l.b16 %v1106
        %v1148 = vunpack.c.h.b16 %v1106
        %v1149 = vpack.c.b16 %v1125, %v1121
        %v1150 = vpack.c.b16 %v1126, %v1122
        %v1151 = vpack.c.b16 %v1127, %v1123
        %v1152 = vpack.c.b16 %v1128, %v1124
        %v1153 = vpack.c.b16 %v1133, %v1129
        %v1154 = vpack.c.b16 %v1134, %v1130
        %v1155 = vpack.c.b16 %v1135, %v1131
        %v1156 = vpack.c.b16 %v1136, %v1132
        %v1157 = vpack.c.b16 %v1141, %v1137
        %v1158 = vpack.c.b16 %v1142, %v1138
        %v1159 = vpack.c.b16 %v1143, %v1139
        %v1160 = vpack.c.b16 %v1144, %v1140
        %v1161 = vpack.c.b16 %v1145, %v1145
        %v1162 = vpack.c.b16 %v1146, %v1146
        %v1163 = vpack.c.b16 %v1147, %v1147
        %v1164 = vpack.c.b16 %v1148, %v1148
        %vm1177 = vcmask 408576
        %v1179 = vsel %vm1177, %v1092, 0
        %vm1181 = vcmask 1040384
        %v1183 = vsel %vm1181, %v1161, 0
        %v1186 = vsel %vm1181, %v1162, 0
        %v1189 = vsel %vm1181, %v1163, 0
        %v1192 = vsel %vm1181, %v1164, 0
        %1194 = vmatpush.bf16.msra.mxu0 0
        %1195 = vmatpush.bf16.msra.mxu0 0
        %1196 = vmatpush.bf16.msra.mxu0 0
        %1197 = vmatpush.bf16.msra.mxu0 0
        %1198 = vmatpush.bf16.msra.mxu0 %v1183
        %1199 = vmatpush.bf16.msra.mxu0 %v1157
        %1200 = vmatpush.bf16.msra.mxu0 %v1153
        %1201 = vmatpush.bf16.msra.mxu0 %v1149
        %1202 = vmatmul.bf16.gmra.mxu0 %v1179
        %v1203 = vpop.f32.mrf.mxu0
        %v1204 = vadd.f32 0.0, %v1203
        %v1205 = vpop.f32.mrf.mxu0
        %1206 = vdwg.mxu0
        %1207 = vmatpush.bf16.msra.mxu0 0
        %1208 = vmatpush.bf16.msra.mxu0 0
        %1209 = vmatpush.bf16.msra.mxu0 0
        %1210 = vmatpush.bf16.msra.mxu0 0
        %1211 = vmatpush.bf16.msra.mxu0 %v1186
        %1212 = vmatpush.bf16.msra.mxu0 %v1158
        %1213 = vmatpush.bf16.msra.mxu0 %v1154
        %1214 = vmatpush.bf16.msra.mxu0 %v1150
        %1215 = vmatmul.bf16.gmra.mxu0 %v1179
        %v1216 = vpop.f32.mrf.mxu0
        %v1217 = vadd.f32 0.0, %v1216
        %v1218 = vpop.f32.mrf.mxu0
        %1219 = vdwg.mxu0
        %1220 = vmatpush.bf16.msra.mxu0 0
        %1221 = vmatpush.bf16.msra.mxu0 0
        %1222 = vmatpush.bf16.msra.mxu0 0
        %1223 = vmatpush.bf16.msra.mxu0 0
        %1224 = vmatpush.bf16.msra.mxu0 %v1189
        %1225 = vmatpush.bf16.msra.mxu0 %v1159
        %1226 = vmatpush.bf16.msra.mxu0 %v1155
        %1227 = vmatpush.bf16.msra.mxu0 %v1151
        %1228 = vmatmul.bf16.gmra.mxu0 %v1179
        %v1229 = vpop.f32.mrf.mxu0
        %v1230 = vadd.f32 0.0, %v1229
        %v1231 = vpop.f32.mrf.mxu0
        %1232 = vdwg.mxu0
        %1233 = vmatpush.bf16.msra.mxu0 0
        %1234 = vmatpush.bf16.msra.mxu0 0
        %1235 = vmatpush.bf16.msra.mxu0 0
        %1236 = vmatpush.bf16.msra.mxu0 0
        %1237 = vmatpush.bf16.msra.mxu0 %v1192
        %1238 = vmatpush.bf16.msra.mxu0 %v1160
        %1239 = vmatpush.bf16.msra.mxu0 %v1156
        %1240 = vmatpush.bf16.msra.mxu0 %v1152
        %1241 = vmatmul.bf16.gmra.mxu0 %v1179
        %v1242 = vpop.f32.mrf.mxu0
        %v1243 = vadd.f32 0.0, %v1242
        %v1244 = vpop.f32.mrf.mxu0
        %1245 = vdwg.mxu0
        %s1246 = smul.u32 %s28, 512
        %s1247 = sshra.s32 %s1246, 7
        %s1248 = sand.u32 %s1246, 127
        %s1249 = smul.addr %s1247, 2
        %s1250 = scalar_lea.vmem %s410, %s1249
        %v1251 = vld [vmem:[%s1250] sm:$0xff]
        %v1252 = vld [vmem:[%s6] sm:$0xf]
        %v1253 = vpack.c.bf16 %v1204, %v1204
        %v1254 = vpack.c.bf16 %v1217, %v1217
        %v1255 = vpack.c.bf16 %v1230, %v1230
        %v1256 = vpack.c.bf16 %v1243, %v1243
        %v1257 = vld [vmem:[%s7] sm:$0xf]
        %1259 = vst [vmem:[#allocation1] ss:$4 sm:$0xff] %v1251
        %v1260 = vld.sshfl [vmem:[#allocation1] sm:$0xff pattern:$0x73625140]
        %v1261 = vld.sshfl [vmem:[#allocation1 + $0x8] sm:$0xff pattern:$0x73625140]
        %v1262 = vld.sshfl [vmem:[#allocation1 + $0x10] sm:$0xff pattern:$0x73625140]
        %v1263 = vld.sshfl [vmem:[#allocation1 + $0x18] sm:$0xff pattern:$0x73625140]
        %vm1264 = vcmask 31744
        %v1266 = vsel %vm1264, %v1257, 0
        %vm1268 = vcmask 1041408
        %v1269 = vsel %vm1268, %v1260, 0
        %v1271 = vsel %vm1268, %v1261, 0
        %v1273 = vsel %vm1268, %v1262, 0
        %v1275 = vsel %vm1268, %v1263, 0
        %1277 = vmatpush.bf16.msra.mxu0 0
        %1278 = vmatpush.bf16.msra.mxu0 0
        %1279 = vmatpush.bf16.msra.mxu0 0
        %1280 = vmatpush.bf16.msra.mxu0 0
        %1281 = vmatpush.bf16.msra.mxu0 0
        %1282 = vmatpush.bf16.msra.mxu0 0
        %1283 = vmatpush.bf16.msra.mxu0 0
        %1284 = vmatpush.bf16.msra.mxu0 %v1269
        %1285 = vmatmul.bf16.gmra.mxu0 %v1266
        %v1286 = vpop.f32.mrf.mxu0
        %v1287 = vadd.f32 0.0, %v1286
        %v1288 = vpop.f32.mrf.mxu0
        %1289 = vdwg.mxu0
        %1290 = vmatpush.bf16.msra.mxu0 0
        %1291 = vmatpush.bf16.msra.mxu0 0
        %1292 = vmatpush.bf16.msra.mxu0 0
        %1293 = vmatpush.bf16.msra.mxu0 0
        %1294 = vmatpush.bf16.msra.mxu0 0
        %1295 = vmatpush.bf16.msra.mxu0 0
        %1296 = vmatpush.bf16.msra.mxu0 0
        %1297 = vmatpush.bf16.msra.mxu0 %v1271
        %1298 = vmatmul.bf16.gmra.mxu0 %v1266
        %v1299 = vpop.f32.mrf.mxu0
        %v1300 = vadd.f32 0.0, %v1299
        %v1301 = vpop.f32.mrf.mxu0
        %1302 = vdwg.mxu0
        %1303 = vmatpush.bf16.msra.mxu0 0
        %1304 = vmatpush.bf16.msra.mxu0 0
        %1305 = vmatpush.bf16.msra.mxu0 0
        %1306 = vmatpush.bf16.msra.mxu0 0
        %1307 = vmatpush.bf16.msra.mxu0 0
        %1308 = vmatpush.bf16.msra.mxu0 0
        %1309 = vmatpush.bf16.msra.mxu0 0
        %1310 = vmatpush.bf16.msra.mxu0 %v1273
        %1311 = vmatmul.bf16.gmra.mxu0 %v1266
        %v1312 = vpop.f32.mrf.mxu0
        %v1313 = vadd.f32 0.0, %v1312
        %v1314 = vpop.f32.mrf.mxu0
        %1315 = vdwg.mxu0
        %1316 = vmatpush.bf16.msra.mxu0 0
        %1317 = vmatpush.bf16.msra.mxu0 0
        %1318 = vmatpush.bf16.msra.mxu0 0
        %1319 = vmatpush.bf16.msra.mxu0 0
        %1320 = vmatpush.bf16.msra.mxu0 0
        %1321 = vmatpush.bf16.msra.mxu0 0
        %1322 = vmatpush.bf16.msra.mxu0 0
        %1323 = vmatpush.bf16.msra.mxu0 %v1275
        %1324 = vmatmul.bf16.gmra.mxu0 %v1266
        %v1325 = vpop.f32.mrf.mxu0
        %v1326 = vadd.f32 0.0, %v1325
        %v1327 = vpop.f32.mrf.mxu0
        %1328 = vdwg.mxu0
        %v1330 = vsel %vm1264, %v1252, 0
        %v1333 = vsel %vm1268, %v1253, 0
        %v1336 = vsel %vm1268, %v1254, 0
        %v1339 = vsel %vm1268, %v1255, 0
        %v1342 = vsel %vm1268, %v1256, 0
        %1344 = vmatpush.bf16.msra.mxu0 0
        %1345 = vmatpush.bf16.msra.mxu0 0
        %1346 = vmatpush.bf16.msra.mxu0 0
        %1347 = vmatpush.bf16.msra.mxu0 0
        %1348 = vmatpush.bf16.msra.mxu0 0
        %1349 = vmatpush.bf16.msra.mxu0 0
        %1350 = vmatpush.bf16.msra.mxu0 0
        %1351 = vmatpush.bf16.msra.mxu0 %v1333
        %1352 = vmatmul.bf16.gmra.mxu0 %v1330
        %v1353 = vpop.f32.mrf.mxu0
        %v1354 = vadd.f32 %v1287, %v1353
        %v1355 = vpop.f32.mrf.mxu0
        %1356 = vdwg.mxu0
        %1357 = vmatpush.bf16.msra.mxu0 0
        %1358 = vmatpush.bf16.msra.mxu0 0
        %1359 = vmatpush.bf16.msra.mxu0 0
        %1360 = vmatpush.bf16.msra.mxu0 0
        %1361 = vmatpush.bf16.msra.mxu0 0
        %1362 = vmatpush.bf16.msra.mxu0 0
        %1363 = vmatpush.bf16.msra.mxu0 0
        %1364 = vmatpush.bf16.msra.mxu0 %v1336
        %1365 = vmatmul.bf16.gmra.mxu0 %v1330
        %v1366 = vpop.f32.mrf.mxu0
        %v1367 = vadd.f32 %v1300, %v1366
        %v1368 = vpop.f32.mrf.mxu0
        %1369 = vdwg.mxu0
        %1370 = vmatpush.bf16.msra.mxu0 0
        %1371 = vmatpush.bf16.msra.mxu0 0
        %1372 = vmatpush.bf16.msra.mxu0 0
        %1373 = vmatpush.bf16.msra.mxu0 0
        %1374 = vmatpush.bf16.msra.mxu0 0
        %1375 = vmatpush.bf16.msra.mxu0 0
        %1376 = vmatpush.bf16.msra.mxu0 0
        %1377 = vmatpush.bf16.msra.mxu0 %v1339
        %1378 = vmatmul.bf16.gmra.mxu0 %v1330
        %v1379 = vpop.f32.mrf.mxu0
        %v1380 = vadd.f32 %v1313, %v1379
        %v1381 = vpop.f32.mrf.mxu0
        %1382 = vdwg.mxu0
        %1383 = vmatpush.bf16.msra.mxu0 0
        %1384 = vmatpush.bf16.msra.mxu0 0
        %1385 = vmatpush.bf16.msra.mxu0 0
        %1386 = vmatpush.bf16.msra.mxu0 0
        %1387 = vmatpush.bf16.msra.mxu0 0
        %1388 = vmatpush.bf16.msra.mxu0 0
        %1389 = vmatpush.bf16.msra.mxu0 0
        %1390 = vmatpush.bf16.msra.mxu0 %v1342
        %1391 = vmatmul.bf16.gmra.mxu0 %v1330
        %v1392 = vpop.f32.mrf.mxu0
        %v1393 = vadd.f32 %v1326, %v1392
        %v1394 = vpop.f32.mrf.mxu0
        %1395 = vdwg.mxu0
        %v1396 = vld [vmem:[%s8] sm:$0xff]
        %1398 = vset.pattern.permute.xlu0 0
        %1399 = vperm.xlu0 %1398, %v1396
        %v1400 = vpop.permute.xlu0 %1399
        %v1402 = vadd.f32 %v1354, %v1400
        %v1403 = vadd.f32 %v1367, %v1400
        %v1404 = vadd.f32 %v1380, %v1400
        %v1405 = vadd.f32 %v1393, %v1400
        %v1406 = vmax.f32 %v1402, 0.0
        %v1407 = vmax.f32 %v1403, 0.0
        %v1408 = vmax.f32 %v1404, 0.0
        %v1409 = vmax.f32 %v1405, 0.0
        %1410 = vst [vmem:[%s405] sm:$0xff] %v1406
        %1411 = vst [vmem:[%s405 + $0x8] sm:$0xff] %v1407
        %1412 = vst [vmem:[%s405 + $0x10] sm:$0xff] %v1408
        %1413 = vst [vmem:[%s405 + $0x18] sm:$0xff] %v1409
        %s1414 = sand.u32 %s244, 1
        %s1415 = scalar_lea.sflag [#allocation5], %s1414
        %s1416 = sand.u32 %s244, 1
        %s1417 = smul.addr %s1416, 32
        %s1418 = scalar_lea.vmem [#allocation4], %s1417
        // Predicated region
        $region84: #{tpu_custom_call.1} parent=74 // pred_check
          %p1419 = pneg %p254
        $region85: #{tpu_custom_call.1} parent=74 // pred_check_branch
          %1421 = sbr.rel (%p1419) target = $region87
        $region86: #{tpu_custom_call.1} parent=74 // pred_region
          %s1422 = smul.u32 4, %s28
          %1424 = vsyncadd %s1415, 0
          %s1425 = smul.addr %s27, 8
          %s1426 = sadd.s32 %s1422, %s1425
          %s1427 = smul.addr %s1426, 8
          %s1428 = scalar_lea.hbm %s9, %s1427
          %s1430 = sshll.u32 %s1418, 4
          %s1431 = int_to_ptr.vmem [resolvable:$true] %s1430
          %s1432 = sshll.u32 %s1428, 4
          %s1433 = int_to_ptr.hbm [resolvable:$true] %s1432
          %1435 = dma.vmem_to_hbm [thread:$0]  %s1431, 512, %s1433, %s1415
        $region87: #{tpu_custom_call.1} parent=74 // pred_fallthru
          _
      $region75: #{tpu_custom_call.1} parent=5 // pred_fallthru
        _
      %p1436 = scmp.le.s32.totalorder 2, %s18
      // Predicated region
      $region88: #{tpu_custom_call.1} parent=5 // pred_check
        %p1437 = pneg %p1436
      $region89: #{tpu_custom_call.1} parent=5 // pred_check_branch
        %1439 = sbr.rel (%p1437) target = $region91
      $region90: #{tpu_custom_call.1} parent=5 // pred_region
        %s1440 = ssub.s32 %s18, 2
        // Predicated region
        $region92: #{tpu_custom_call.1} parent=90 // pred_check
          %p1441 = pneg %p260
        $region93: #{tpu_custom_call.1} parent=90 // pred_check_branch
          %1443 = sbr.rel (%p1441) target = $region95
        $region94: #{tpu_custom_call.1} parent=90 // pred_region
          %s1444 = sand.u32 %s245, 1
          %s1445 = scalar_lea.sflag [#allocation5], %s1444
          %s1446 = sand.u32 %s245, 1
          %s1447 = smul.addr %s1446, 32
          %s1448 = scalar_lea.vmem [#allocation4], %s1447
          %1450 = dma.done %s1445, 512
        $region95: #{tpu_custom_call.1} parent=90 // pred_fallthru
          _
      $region91: #{tpu_custom_call.1} parent=5 // pred_fallthru
        _
    $region6: #{tpu_custom_call.1} parent=1 // loop_footer
      %s22 = sadd.s32 1, %s18
    $region7: #{tpu_custom_call.1} parent=1 // loop_footer_branch
      %17 = sbr.rel target = $region3
    $region8: #{tpu_custom_call.1} parent=1 // loop_exit
      _
    %1451 = vsyncpa [#allocation5], 1
    %s1452 = scalar_lea.sflag [#allocation5], 1
    %1453 = vsyncpa %s1452, 1

</llo_original>
